<compile_context>
chip_gen: v6e
topology: v6e:2x2x1
jax: 0.10.0
libtpu: 0.0.40
codegen_flags: <defaults>
</compile_context>

<pallas_src>
import functools

import numpy as np
import jax
import jax.numpy as jnp
from jax.experimental import pallas as pl
from jax.experimental.pallas import tpu as pltpu

_WINDOW_SIZE = 11
_SIGMA = 1.5


def _gaussian_band_matrix(n, window_size=_WINDOW_SIZE, sigma=_SIGMA):
    """A[i, k] = g[k - i + half] inside the band, 0 outside, so A @ x (and
    x @ A.T) reproduce the zero-padded depthwise Gaussian conv along that axis."""
    half = window_size // 2
    g = np.exp(-((np.arange(window_size) - half) ** 2) / (2.0 * sigma ** 2))
    g = (g / g.sum()).astype(np.float32)
    A = np.zeros((n, n), dtype=np.float32)
    for i in range(n):
        lo = max(0, i - half)
        hi = min(n, i + half + 1)
        A[i, lo:hi] = g[lo - i + half:hi - i + half]
    return A


def _ssim_kernel(c_ref, ah_ref, awt_ref, x1_ref, x2_ref, out_ref, left_ref, *,
                 real_h, real_w):
    B, Hp, Wp = x1_ref.shape
    c1 = c_ref[0]
    c2 = c_ref[1]

    ah = ah_ref[...]    # (Hp, Hp) bf16, shared by all images (no broadcast_to)
    awt = awt_ref[...]  # (Wp, Wp) bf16, single copy (no block-diagonal zeros)

    # --- Left (row) blur: one 2-D MXU dot per image, five blur inputs fused
    # along the lane axis (5*Wp wide, built directly in bf16). ---
    for b in range(B):
        a1 = x1_ref[b].astype(jnp.float32)   # (Hp, Wp)
        a2 = x2_ref[b].astype(jnp.float32)
        fused_b = jnp.concatenate(
            [a1.astype(jnp.bfloat16),
             a2.astype(jnp.bfloat16),
             (a1 * a1).astype(jnp.bfloat16),
             (a2 * a2).astype(jnp.bfloat16),
             (a1 * a2).astype(jnp.bfloat16)],
            axis=-1)                          # (Hp, 5*Wp) bf16
        left_ref[b] = jnp.dot(
            ah, fused_b, preferred_element_type=jnp.float32
        ).astype(jnp.bfloat16)

    # --- Right (column) blur: five lane-aligned tall dots against (Wp, Wp). ---
    blurred = []
    for k in range(5):
        slab = left_ref[:, :, k * Wp:(k + 1) * Wp]          # (B, Hp, Wp) bf16
        slab = slab.reshape(B * Hp, Wp)
        rb = jnp.dot(slab, awt, preferred_element_type=jnp.float32)
        blurred.append(rb.reshape(B, Hp, Wp))
    mu1, mu2, e11, e22, e12 = blurred

    # --- SSIM map (f32 elementwise). ---
    mu1_sq = mu1 * mu1
    mu2_sq = mu2 * mu2
    mu1_mu2 = mu1 * mu2
    sigma1_sq = e11 - mu1_sq
    sigma2_sq = e22 - mu2_sq
    sigma12 = e12 - mu1_mu2

    v1 = 2.0 * sigma12 + c2
    v2 = sigma1_sq + sigma2_sq + c2
    num = (2.0 * mu1_mu2 + c1) * v1
    den = (mu1_sq + mu2_sq + c1) * v2
    # Divide -> EUP reciprocal + VPU multiply (keeps the VALU epilogue short).
    ssim_map = num * pl.reciprocal(den, approx=True)

    # Mask out padded rows/columns (they would otherwise contribute ssim = 1).
    if (Hp > real_h) or (Wp > real_w):
        row = jax.lax.broadcasted_iota(jnp.int32, (Hp, Wp), 0)
        col = jax.lax.broadcasted_iota(jnp.int32, (Hp, Wp), 1)
        keep = (row < real_h) & (col < real_w)
        ssim_map = jnp.where(keep[None, :, :], ssim_map, 0.0)

    # Per-image partial sums; full reduction/mean happens in the wrapper.
    per_image = jnp.sum(jnp.sum(ssim_map, axis=-1), axis=-1)   # (B,)
    out_ref[...] = per_image.reshape(1, 1, B)


def _round_up(x, m):
    return ((x + m - 1) // m) * m


def _vmem_budget_bytes():
    cap = 64 * 1024 * 1024                      # conservative fallback (v7x)
    try:
        info = pltpu.get_tpu_info()
        cap = int(getattr(info, "vmem_capacity_bytes", cap))
    except Exception:
        pass
    # Leave headroom below physical VMEM: ~45 MiB on v7x (64 MiB physical),
    # ~90 MiB on v5e/v6e (128 MiB physical), never above 96 MiB.
    return max(32 * 1024 * 1024, min(int(cap * 0.7), 96 * 1024 * 1024))


def _pick_block_size(m, hp, wp, budget_bytes):
    # Resident set per grid step: 2 f32 inputs x 2 pipeline buffers (16 B/px),
    # bf16 `left` scratch (10 B/px), five f32 blurred maps (20 B/px) and the
    # f32 epilogue temporaries -> budget ~150 bytes per padded pixel per image,
    # plus the (double-buffered) bf16 constants.
    per_image = 150 * hp * wp
    fixed = 4 * (hp * hp + wp * wp) + (1 << 20)
    avail = max(budget_bytes - fixed, per_image)
    b = max(1, int(avail // per_image))
    b = min(b, m, 64)                 # cap the unrolled per-image dot loop
    if m >= 2:
        b = min(b, -(-m // 2))        # G >= 2 so both v7x TensorCores get work
    return max(1, int(b))


def ssim_loss(img1, img2, window_size=_WINDOW_SIZE, val_range=None):
    """Equivalent of SSIM(window_size=11, size_average=True)(img1, img2)."""
    N, C, H, W = img1.shape
    M = N * C

    H_pad = _round_up(H, 8)      # sublane multiple
    W_pad = _round_up(W, 128)    # lane multiple -> dense (8,128) tiles, free 5-way slicing

    # Band matrices built at padded size: padded rows/cols of the image are
    # zero, so blurred values at real positions match the reference conv2d
    # (zero padding) exactly; padded positions are masked in the kernel.
    ah = _gaussian_band_matrix(H_pad, window_size)
    awt = _gaussian_band_matrix(W_pad, window_size).T
    ah_bf16 = jnp.asarray(ah, dtype=jnp.bfloat16)
    awt_bf16 = jnp.asarray(awt, dtype=jnp.bfloat16)
    # TODO(synk): for very large H/W, exploit the 11-wide band (pltpu.roll
    # shifted FMAs or 128-wide band-strip matmuls) and tile within an image
    # instead of dense (H,H)/(W,W) matrices; matters most on v5e.

    # val_range=None path of the reference: data-dependent dynamic range.
    if val_range is None:
        max_val = jnp.where(jnp.max(img1) > 128, 255.0, 1.0)
        min_val = jnp.where(jnp.min(img1) < -0.5, -1.0, 0.0)
        l = max_val - min_val
    else:
        l = val_range
    c1 = (0.01 * l) ** 2
    c2 = (0.03 * l) ** 2
    cvals = jnp.stack([jnp.asarray(c1, jnp.float32),
                       jnp.asarray(c2, jnp.float32)])          # -> SMEM scalars

    budget = _vmem_budget_bytes()
    B = _pick_block_size(M, H_pad, W_pad, int(budget * 0.8))
    G = pl.cdiv(M, B)
    M_pad = G * B

    x1 = jnp.pad(img1.reshape(M, H, W),
                 ((0, M_pad - M), (0, H_pad - H), (0, W_pad - W)))
    x2 = jnp.pad(img2.reshape(M, H, W),
                 ((0, M_pad - M), (0, H_pad - H), (0, W_pad - W)))

    kernel = functools.partial(_ssim_kernel, real_h=H, real_w=W)

    partial = pl.pallas_call(
        kernel,
        out_shape=jax.ShapeDtypeStruct((G, 1, B), jnp.float32),
        grid=(G,),
        in_specs=[
            pl.BlockSpec(memory_space=pltpu.MemorySpace.SMEM),      # c1, c2
            pl.BlockSpec((H_pad, H_pad), lambda g: (0, 0)),         # A_H
            pl.BlockSpec((W_pad, W_pad), lambda g: (0, 0)),         # A_W^T
            pl.BlockSpec((B, H_pad, W_pad), lambda g: (g, 0, 0)),   # img1 block
            pl.BlockSpec((B, H_pad, W_pad), lambda g: (g, 0, 0)),   # img2 block
        ],
        out_specs=pl.BlockSpec((1, 1, B), lambda g: (g, 0, 0)),
        scratch_shapes=[pltpu.VMEM((B, H_pad, 5 * W_pad), jnp.bfloat16)],
        compiler_params=pltpu.CompilerParams(
            dimension_semantics=("parallel",),
            vmem_limit_bytes=int(budget),
        ),
    )(cvals, ah_bf16, awt_bf16, x1, x2)

    per_image = partial.reshape(M_pad)[:M]
    s_score = jnp.sum(per_image) / (M * H * W)
    return (1.0 - s_score).astype(jnp.float32)


if __name__ == "__main__":
    key = jax.random.PRNGKey(0)
    k1, k2 = jax.random.split(key)
    img1 = jax.random.normal(k1, (2, 4, 16, 16), dtype=jnp.float32)
    img2 = jax.random.normal(k2, (2, 4, 16, 16), dtype=jnp.float32)

    loss = ssim_loss(img1, img2)
    jax.block_until_ready(loss)
    print("KERNEL_OK")
</pallas_src>

<mosaic_0001>
module attributes {stable_mosaic.version = 11 : i64} {
  func.func @_ssim_kernel(%arg0: i32, %arg1: memref<2xf32, #tpu.memory_space<smem>>, %arg2: memref<16x16xbf16, #tpu.memory_space<vmem>>, %arg3: memref<128x128xbf16, #tpu.memory_space<vmem>>, %arg4: memref<4x16x128xf32, #tpu.memory_space<vmem>>, %arg5: memref<4x16x128xf32, #tpu.memory_space<vmem>>, %arg6: memref<1x1x4xf32, #tpu.memory_space<vmem>>, %arg7: memref<4x16x640xbf16, #tpu.memory_space<vmem>>) attributes {dimension_semantics = [#tpu.dimension_semantics<parallel>], iteration_bounds = array<i64: 2>, scalar_prefetch = 0 : i64, scratch_operands = 1 : i64, tpu.core_type = #tpu.core_type<tc>, window_params = [{transform_indices = @transform_0, window_bounds = array<i64: 2>}, {pipeline_mode = #tpu.pipeline_mode<synchronous>, transform_indices = @transform_1, window_bounds = array<i64: 16, 16>}, {pipeline_mode = #tpu.pipeline_mode<synchronous>, transform_indices = @transform_2, window_bounds = array<i64: 128, 128>}, {transform_indices = @transform_3, window_bounds = array<i64: 4, 16, 128>}, {transform_indices = @transform_4, window_bounds = array<i64: 4, 16, 128>}, {transform_indices = @transform_5, window_bounds = array<i64: 1, 1, 4>}]} {
    %c0 = arith.constant 0 : index
    %0 = memref.load %arg1[%c0] : memref<2xf32, #tpu.memory_space<smem>>
    %c1 = arith.constant 1 : index
    %1 = memref.load %arg1[%c1] : memref<2xf32, #tpu.memory_space<smem>>
    %c0_0 = arith.constant 0 : index
    %c0_1 = arith.constant 0 : index
    %2 = vector.load %arg2[%c0_0, %c0_1] : memref<16x16xbf16, #tpu.memory_space<vmem>>, vector<16x16xbf16>
    %c0_2 = arith.constant 0 : index
    %c0_3 = arith.constant 0 : index
    %3 = vector.load %arg3[%c0_2, %c0_3] : memref<128x128xbf16, #tpu.memory_space<vmem>>, vector<128x128xbf16>
    %c0_4 = arith.constant 0 : index
    %c0_5 = arith.constant 0 : index
    %c0_6 = arith.constant 0 : index
    %4 = vector.load %arg4[%c0_4, %c0_5, %c0_6] : memref<4x16x128xf32, #tpu.memory_space<vmem>>, vector<1x16x128xf32>
    %5 = vector.shape_cast %4 : vector<1x16x128xf32> to vector<16x128xf32>
    %c0_7 = arith.constant 0 : index
    %c0_8 = arith.constant 0 : index
    %c0_9 = arith.constant 0 : index
    %6 = vector.load %arg5[%c0_7, %c0_8, %c0_9] : memref<4x16x128xf32, #tpu.memory_space<vmem>>, vector<1x16x128xf32>
    %7 = vector.shape_cast %6 : vector<1x16x128xf32> to vector<16x128xf32>
    %8 = arith.truncf %5 : vector<16x128xf32> to vector<16x128xbf16>
    %9 = arith.truncf %7 : vector<16x128xf32> to vector<16x128xbf16>
    %10 = arith.mulf %5, %5 : vector<16x128xf32>
    %11 = arith.truncf %10 : vector<16x128xf32> to vector<16x128xbf16>
    %12 = arith.mulf %7, %7 : vector<16x128xf32>
    %13 = arith.truncf %12 : vector<16x128xf32> to vector<16x128xbf16>
    %14 = arith.mulf %5, %7 : vector<16x128xf32>
    %15 = arith.truncf %14 : vector<16x128xf32> to vector<16x128xbf16>
    %16 = tpu.concatenate %8, %9, %11, %13, %15 in 1 : vector<16x128xbf16>, vector<16x128xbf16>, vector<16x128xbf16>, vector<16x128xbf16>, vector<16x128xbf16> -> vector<16x640xbf16>
    %cst = arith.constant dense<0.000000e+00> : vector<16x640xf32>
    %17 = tpu.matmul %2, %16, %cst {dimension_numbers = #tpu.dot_dimension_numbers<[1], [0], [0], [1], [0, 0, 1, 1], [], []>} : vector<16x16xbf16>, vector<16x640xbf16>, vector<16x640xf32> -> vector<16x640xf32>
    %18 = arith.truncf %17 : vector<16x640xf32> to vector<16x640xbf16>
    %c0_10 = arith.constant 0 : index
    %c0_11 = arith.constant 0 : index
    %c0_12 = arith.constant 0 : index
    %19 = vector.load %arg7[%c0_10, %c0_11, %c0_12] : memref<4x16x640xbf16, #tpu.memory_space<vmem>>, vector<1x16x640xbf16>
    %20 = vector.shape_cast %19 : vector<1x16x640xbf16> to vector<16x640xbf16>
    %21 = vector.shape_cast %18 : vector<16x640xbf16> to vector<1x16x640xbf16>
    tpu.vector_store %arg7[%c0_10, %c0_11, %c0_12], %21 {strides = array<i32>} : memref<4x16x640xbf16, #tpu.memory_space<vmem>>, vector<1x16x640xbf16>,
    %c1_13 = arith.constant 1 : index
    %c0_14 = arith.constant 0 : index
    %c0_15 = arith.constant 0 : index
    %22 = vector.load %arg4[%c1_13, %c0_14, %c0_15] : memref<4x16x128xf32, #tpu.memory_space<vmem>>, vector<1x16x128xf32>
    %23 = vector.shape_cast %22 : vector<1x16x128xf32> to vector<16x128xf32>
    %c1_16 = arith.constant 1 : index
    %c0_17 = arith.constant 0 : index
    %c0_18 = arith.constant 0 : index
    %24 = vector.load %arg5[%c1_16, %c0_17, %c0_18] : memref<4x16x128xf32, #tpu.memory_space<vmem>>, vector<1x16x128xf32>
    %25 = vector.shape_cast %24 : vector<1x16x128xf32> to vector<16x128xf32>
    %26 = arith.truncf %23 : vector<16x128xf32> to vector<16x128xbf16>
    %27 = arith.truncf %25 : vector<16x128xf32> to vector<16x128xbf16>
    %28 = arith.mulf %23, %23 : vector<16x128xf32>
    %29 = arith.truncf %28 : vector<16x128xf32> to vector<16x128xbf16>
    %30 = arith.mulf %25, %25 : vector<16x128xf32>
    %31 = arith.truncf %30 : vector<16x128xf32> to vector<16x128xbf16>
    %32 = arith.mulf %23, %25 : vector<16x128xf32>
    %33 = arith.truncf %32 : vector<16x128xf32> to vector<16x128xbf16>
    %34 = tpu.concatenate %26, %27, %29, %31, %33 in 1 : vector<16x128xbf16>, vector<16x128xbf16>, vector<16x128xbf16>, vector<16x128xbf16>, vector<16x128xbf16> -> vector<16x640xbf16>
    %cst_19 = arith.constant dense<0.000000e+00> : vector<16x640xf32>
    %35 = tpu.matmul %2, %34, %cst_19 {dimension_numbers = #tpu.dot_dimension_numbers<[1], [0], [0], [1], [0, 0, 1, 1], [], []>} : vector<16x16xbf16>, vector<16x640xbf16>, vector<16x640xf32> -> vector<16x640xf32>
    %36 = arith.truncf %35 : vector<16x640xf32> to vector<16x640xbf16>
    %c1_20 = arith.constant 1 : index
    %c0_21 = arith.constant 0 : index
    %c0_22 = arith.constant 0 : index
    %37 = vector.load %arg7[%c1_20, %c0_21, %c0_22] : memref<4x16x640xbf16, #tpu.memory_space<vmem>>, vector<1x16x640xbf16>
    %38 = vector.shape_cast %37 : vector<1x16x640xbf16> to vector<16x640xbf16>
    %39 = vector.shape_cast %36 : vector<16x640xbf16> to vector<1x16x640xbf16>
    tpu.vector_store %arg7[%c1_20, %c0_21, %c0_22], %39 {strides = array<i32>} : memref<4x16x640xbf16, #tpu.memory_space<vmem>>, vector<1x16x640xbf16>,
    %c2 = arith.constant 2 : index
    %c0_23 = arith.constant 0 : index
    %c0_24 = arith.constant 0 : index
    %40 = vector.load %arg4[%c2, %c0_23, %c0_24] : memref<4x16x128xf32, #tpu.memory_space<vmem>>, vector<1x16x128xf32>
    %41 = vector.shape_cast %40 : vector<1x16x128xf32> to vector<16x128xf32>
    %c2_25 = arith.constant 2 : index
    %c0_26 = arith.constant 0 : index
    %c0_27 = arith.constant 0 : index
    %42 = vector.load %arg5[%c2_25, %c0_26, %c0_27] : memref<4x16x128xf32, #tpu.memory_space<vmem>>, vector<1x16x128xf32>
    %43 = vector.shape_cast %42 : vector<1x16x128xf32> to vector<16x128xf32>
    %44 = arith.truncf %41 : vector<16x128xf32> to vector<16x128xbf16>
    %45 = arith.truncf %43 : vector<16x128xf32> to vector<16x128xbf16>
    %46 = arith.mulf %41, %41 : vector<16x128xf32>
    %47 = arith.truncf %46 : vector<16x128xf32> to vector<16x128xbf16>
    %48 = arith.mulf %43, %43 : vector<16x128xf32>
    %49 = arith.truncf %48 : vector<16x128xf32> to vector<16x128xbf16>
    %50 = arith.mulf %41, %43 : vector<16x128xf32>
    %51 = arith.truncf %50 : vector<16x128xf32> to vector<16x128xbf16>
    %52 = tpu.concatenate %44, %45, %47, %49, %51 in 1 : vector<16x128xbf16>, vector<16x128xbf16>, vector<16x128xbf16>, vector<16x128xbf16>, vector<16x128xbf16> -> vector<16x640xbf16>
    %cst_28 = arith.constant dense<0.000000e+00> : vector<16x640xf32>
    %53 = tpu.matmul %2, %52, %cst_28 {dimension_numbers = #tpu.dot_dimension_numbers<[1], [0], [0], [1], [0, 0, 1, 1], [], []>} : vector<16x16xbf16>, vector<16x640xbf16>, vector<16x640xf32> -> vector<16x640xf32>
    %54 = arith.truncf %53 : vector<16x640xf32> to vector<16x640xbf16>
    %c2_29 = arith.constant 2 : index
    %c0_30 = arith.constant 0 : index
    %c0_31 = arith.constant 0 : index
    %55 = vector.load %arg7[%c2_29, %c0_30, %c0_31] : memref<4x16x640xbf16, #tpu.memory_space<vmem>>, vector<1x16x640xbf16>
    %56 = vector.shape_cast %55 : vector<1x16x640xbf16> to vector<16x640xbf16>
    %57 = vector.shape_cast %54 : vector<16x640xbf16> to vector<1x16x640xbf16>
    tpu.vector_store %arg7[%c2_29, %c0_30, %c0_31], %57 {strides = array<i32>} : memref<4x16x640xbf16, #tpu.memory_space<vmem>>, vector<1x16x640xbf16>,
    %c3 = arith.constant 3 : index
    %c0_32 = arith.constant 0 : index
    %c0_33 = arith.constant 0 : index
    %58 = vector.load %arg4[%c3, %c0_32, %c0_33] : memref<4x16x128xf32, #tpu.memory_space<vmem>>, vector<1x16x128xf32>
    %59 = vector.shape_cast %58 : vector<1x16x128xf32> to vector<16x128xf32>
    %c3_34 = arith.constant 3 : index
    %c0_35 = arith.constant 0 : index
    %c0_36 = arith.constant 0 : index
    %60 = vector.load %arg5[%c3_34, %c0_35, %c0_36] : memref<4x16x128xf32, #tpu.memory_space<vmem>>, vector<1x16x128xf32>
    %61 = vector.shape_cast %60 : vector<1x16x128xf32> to vector<16x128xf32>
    %62 = arith.truncf %59 : vector<16x128xf32> to vector<16x128xbf16>
    %63 = arith.truncf %61 : vector<16x128xf32> to vector<16x128xbf16>
    %64 = arith.mulf %59, %59 : vector<16x128xf32>
    %65 = arith.truncf %64 : vector<16x128xf32> to vector<16x128xbf16>
    %66 = arith.mulf %61, %61 : vector<16x128xf32>
    %67 = arith.truncf %66 : vector<16x128xf32> to vector<16x128xbf16>
    %68 = arith.mulf %59, %61 : vector<16x128xf32>
    %69 = arith.truncf %68 : vector<16x128xf32> to vector<16x128xbf16>
    %70 = tpu.concatenate %62, %63, %65, %67, %69 in 1 : vector<16x128xbf16>, vector<16x128xbf16>, vector<16x128xbf16>, vector<16x128xbf16>, vector<16x128xbf16> -> vector<16x640xbf16>
    %cst_37 = arith.constant dense<0.000000e+00> : vector<16x640xf32>
    %71 = tpu.matmul %2, %70, %cst_37 {dimension_numbers = #tpu.dot_dimension_numbers<[1], [0], [0], [1], [0, 0, 1, 1], [], []>} : vector<16x16xbf16>, vector<16x640xbf16>, vector<16x640xf32> -> vector<16x640xf32>
    %72 = arith.truncf %71 : vector<16x640xf32> to vector<16x640xbf16>
    %c3_38 = arith.constant 3 : index
    %c0_39 = arith.constant 0 : index
    %c0_40 = arith.constant 0 : index
    %73 = vector.load %arg7[%c3_38, %c0_39, %c0_40] : memref<4x16x640xbf16, #tpu.memory_space<vmem>>, vector<1x16x640xbf16>
    %74 = vector.shape_cast %73 : vector<1x16x640xbf16> to vector<16x640xbf16>
    %75 = vector.shape_cast %72 : vector<16x640xbf16> to vector<1x16x640xbf16>
    tpu.vector_store %arg7[%c3_38, %c0_39, %c0_40], %75 {strides = array<i32>} : memref<4x16x640xbf16, #tpu.memory_space<vmem>>, vector<1x16x640xbf16>,
    %c0_41 = arith.constant 0 : index
    %c0_42 = arith.constant 0 : index
    %c0_43 = arith.constant 0 : index
    %76 = vector.load %arg7[%c0_41, %c0_42, %c0_43] : memref<4x16x640xbf16, #tpu.memory_space<vmem>>, vector<4x16x128xbf16>
    %77 = vector.shape_cast %76 : vector<4x16x128xbf16> to vector<64x128xbf16>
    %cst_44 = arith.constant dense<0.000000e+00> : vector<64x128xf32>
    %78 = tpu.matmul %77, %3, %cst_44 {dimension_numbers = #tpu.dot_dimension_numbers<[1], [0], [0], [1], [0, 0, 1, 1], [], []>} : vector<64x128xbf16>, vector<128x128xbf16>, vector<64x128xf32> -> vector<64x128xf32>
    %79 = vector.shape_cast %78 : vector<64x128xf32> to vector<4x16x128xf32>
    %c0_45 = arith.constant 0 : index
    %c0_46 = arith.constant 0 : index
    %c128 = arith.constant 128 : index
    %80 = vector.load %arg7[%c0_45, %c0_46, %c128] : memref<4x16x640xbf16, #tpu.memory_space<vmem>>, vector<4x16x128xbf16>
    %81 = vector.shape_cast %80 : vector<4x16x128xbf16> to vector<64x128xbf16>
    %cst_47 = arith.constant dense<0.000000e+00> : vector<64x128xf32>
    %82 = tpu.matmul %81, %3, %cst_47 {dimension_numbers = #tpu.dot_dimension_numbers<[1], [0], [0], [1], [0, 0, 1, 1], [], []>} : vector<64x128xbf16>, vector<128x128xbf16>, vector<64x128xf32> -> vector<64x128xf32>
    %83 = vector.shape_cast %82 : vector<64x128xf32> to vector<4x16x128xf32>
    %c0_48 = arith.constant 0 : index
    %c0_49 = arith.constant 0 : index
    %c256 = arith.constant 256 : index
    %84 = vector.load %arg7[%c0_48, %c0_49, %c256] : memref<4x16x640xbf16, #tpu.memory_space<vmem>>, vector<4x16x128xbf16>
    %85 = vector.shape_cast %84 : vector<4x16x128xbf16> to vector<64x128xbf16>
    %cst_50 = arith.constant dense<0.000000e+00> : vector<64x128xf32>
    %86 = tpu.matmul %85, %3, %cst_50 {dimension_numbers = #tpu.dot_dimension_numbers<[1], [0], [0], [1], [0, 0, 1, 1], [], []>} : vector<64x128xbf16>, vector<128x128xbf16>, vector<64x128xf32> -> vector<64x128xf32>
    %87 = vector.shape_cast %86 : vector<64x128xf32> to vector<4x16x128xf32>
    %c0_51 = arith.constant 0 : index
    %c0_52 = arith.constant 0 : index
    %c384 = arith.constant 384 : index
    %88 = vector.load %arg7[%c0_51, %c0_52, %c384] : memref<4x16x640xbf16, #tpu.memory_space<vmem>>, vector<4x16x128xbf16>
    %89 = vector.shape_cast %88 : vector<4x16x128xbf16> to vector<64x128xbf16>
    %cst_53 = arith.constant dense<0.000000e+00> : vector<64x128xf32>
    %90 = tpu.matmul %89, %3, %cst_53 {dimension_numbers = #tpu.dot_dimension_numbers<[1], [0], [0], [1], [0, 0, 1, 1], [], []>} : vector<64x128xbf16>, vector<128x128xbf16>, vector<64x128xf32> -> vector<64x128xf32>
    %91 = vector.shape_cast %90 : vector<64x128xf32> to vector<4x16x128xf32>
    %c0_54 = arith.constant 0 : index
    %c0_55 = arith.constant 0 : index
    %c512 = arith.constant 512 : index
    %92 = vector.load %arg7[%c0_54, %c0_55, %c512] : memref<4x16x640xbf16, #tpu.memory_space<vmem>>, vector<4x16x128xbf16>
    %93 = vector.shape_cast %92 : vector<4x16x128xbf16> to vector<64x128xbf16>
    %cst_56 = arith.constant dense<0.000000e+00> : vector<64x128xf32>
    %94 = tpu.matmul %93, %3, %cst_56 {dimension_numbers = #tpu.dot_dimension_numbers<[1], [0], [0], [1], [0, 0, 1, 1], [], []>} : vector<64x128xbf16>, vector<128x128xbf16>, vector<64x128xf32> -> vector<64x128xf32>
    %95 = vector.shape_cast %94 : vector<64x128xf32> to vector<4x16x128xf32>
    %96 = arith.mulf %79, %79 : vector<4x16x128xf32>
    %97 = arith.mulf %83, %83 : vector<4x16x128xf32>
    %98 = arith.mulf %79, %83 : vector<4x16x128xf32>
    %99 = arith.subf %87, %96 : vector<4x16x128xf32>
    %100 = arith.subf %91, %97 : vector<4x16x128xf32>
    %101 = arith.subf %95, %98 : vector<4x16x128xf32>
    %cst_57 = arith.constant 2.000000e+00 : f32
    %102 = vector.broadcast %cst_57 : f32 to vector<4x16x128xf32>
    %103 = arith.mulf %102, %101 : vector<4x16x128xf32>
    %104 = vector.broadcast %1 : f32 to vector<4x16x128xf32>
    %105 = arith.addf %103, %104 : vector<4x16x128xf32>
    %106 = arith.addf %99, %100 : vector<4x16x128xf32>
    %107 = vector.broadcast %1 : f32 to vector<4x16x128xf32>
    %108 = arith.addf %106, %107 : vector<4x16x128xf32>
    %cst_58 = arith.constant 2.000000e+00 : f32
    %109 = vector.broadcast %cst_58 : f32 to vector<4x16x128xf32>
    %110 = arith.mulf %109, %98 : vector<4x16x128xf32>
    %111 = vector.broadcast %0 : f32 to vector<4x16x128xf32>
    %112 = arith.addf %110, %111 : vector<4x16x128xf32>
    %113 = arith.mulf %112, %105 : vector<4x16x128xf32>
    %114 = arith.addf %96, %97 : vector<4x16x128xf32>
    %115 = vector.broadcast %0 : f32 to vector<4x16x128xf32>
    %116 = arith.addf %114, %115 : vector<4x16x128xf32>
    %117 = arith.mulf %116, %108 : vector<4x16x128xf32>
    %118 = tpu.reciprocal %117 {approx = true} : vector<4x16x128xf32> -> vector<4x16x128xf32>
    %119 = arith.mulf %113, %118 : vector<4x16x128xf32>
    %120 = tpu.iota {dimensions = array<i32: 0>} : vector<16x128xi32>
    %121 = tpu.iota {dimensions = array<i32: 1>} : vector<16x128xi32>
    %c16_i32 = arith.constant 16 : i32
    %122 = vector.broadcast %c16_i32 : i32 to vector<16x128xi32>
    %123 = arith.cmpi slt, %120, %122 : vector<16x128xi32>
    %c16_i32_59 = arith.constant 16 : i32
    %124 = vector.broadcast %c16_i32_59 : i32 to vector<16x128xi32>
    %125 = arith.cmpi slt, %121, %124 : vector<16x128xi32>
    %126 = arith.andi %123, %125 : vector<16x128xi1>
    %127 = vector.shape_cast %126 : vector<16x128xi1> to vector<1x16x128xi1>
    %cst_60 = arith.constant 0.000000e+00 : f32
    %128 = vector.shape_cast %127 : vector<1x16x128xi1> to vector<1x16x128xi1>
    %129 = vector.broadcast %128 : vector<1x16x128xi1> to vector<4x16x128xi1>
    %130 = vector.broadcast %cst_60 : f32 to vector<4x16x128xf32>
    %131 = arith.select %129, %119, %130 : vector<4x16x128xi1>, vector<4x16x128xf32>
    %cst_61 = arith.constant dense<0.000000e+00> : vector<4x16xf32>
    %132 = vector.multi_reduction <add>, %131, %cst_61 [2] : vector<4x16x128xf32> to vector<4x16xf32>
    %cst_62 = arith.constant dense<0.000000e+00> : vector<4xf32>
    %133 = vector.multi_reduction <add>, %132, %cst_62 [1] : vector<4x16xf32> to vector<4xf32>
    %134 = vector.shape_cast %133 : vector<4xf32> to vector<1x1x4xf32>
    %c0_63 = arith.constant 0 : index
    %c0_64 = arith.constant 0 : index
    %c0_65 = arith.constant 0 : index
    %135 = vector.load %arg6[%c0_63, %c0_64, %c0_65] : memref<1x1x4xf32, #tpu.memory_space<vmem>>, vector<1x1x4xf32>
    tpu.vector_store %arg6[%c0_63, %c0_64, %c0_65], %134 {strides = array<i32>} : memref<1x1x4xf32, #tpu.memory_space<vmem>>, vector<1x1x4xf32>,
    return
  }
  func.func @transform_0(%arg0: i32) -> i32 {
    %c0_i32 = arith.constant 0 : i32
    %c0_i32_0 = arith.constant 0 : i32
    return %c0_i32 : i32
  }
  func.func @transform_1(%arg0: i32) -> (i32, i32) {
    %c0_i32 = arith.constant 0 : i32
    %c0_i32_0 = arith.constant 0 : i32
    %c0_i32_1 = arith.constant 0 : i32
    return %c0_i32, %c0_i32_0 : i32, i32
  }
  func.func @transform_2(%arg0: i32) -> (i32, i32) {
    %c0_i32 = arith.constant 0 : i32
    %c0_i32_0 = arith.constant 0 : i32
    %c0_i32_1 = arith.constant 0 : i32
    return %c0_i32, %c0_i32_0 : i32, i32
  }
  func.func @transform_3(%arg0: i32) -> (i32, i32, i32) {
    %c0_i32 = arith.constant 0 : i32
    %c0_i32_0 = arith.constant 0 : i32
    %c0_i32_1 = arith.constant 0 : i32
    return %arg0, %c0_i32, %c0_i32_0 : i32, i32, i32
  }
  func.func @transform_4(%arg0: i32) -> (i32, i32, i32) {
    %c0_i32 = arith.constant 0 : i32
    %c0_i32_0 = arith.constant 0 : i32
    %c0_i32_1 = arith.constant 0 : i32
    return %arg0, %c0_i32, %c0_i32_0 : i32, i32, i32
  }
  func.func @transform_5(%arg0: i32) -> (i32, i32, i32) {
    %c0_i32 = arith.constant 0 : i32
    %c0_i32_0 = arith.constant 0 : i32
    %c0_i32_1 = arith.constant 0 : i32
    return %arg0, %c0_i32, %c0_i32_0 : i32, i32, i32
  }
}

</mosaic_0001>

<llo_original>
// kernel: tpu_custom_call.1
$region0: #{tpu_custom_call.1}
  #allocation0 [shape = 'u32[]', space=smem, size = 0x4, offset = 0x4, fixed_abs, tag = 'smem constant byte address 0x4 - core index']
  #allocation1 [shape = 'u32[144,128]{1,0:T(1,128)}', space=vmem, size = 0x12000, scoped, tag = 'internal scratch']
  #allocation2 [shape = 'bf16[4,16,640]{2,1,0:T(8,128)(2,1)}', space=vmem, size = 0x14000, scoped, tag = 'scratch operand']
  %s0 = inlined_call_operand.hbm [shape: f32[2], index: 0, kind: input, shape index: {}]
  %s1 = inlined_call_operand.hbm [shape: bf16[16,16], index: 1, kind: input, shape index: {}]
  %s2 = inlined_call_operand.hbm [shape: bf16[128,128], index: 2, kind: input, shape index: {}]
  %s3 = inlined_call_operand.hbm [shape: f32[8,16,128], index: 3, kind: input, shape index: {}]
  %s4 = inlined_call_operand.hbm [shape: f32[8,16,128], index: 4, kind: input, shape index: {}]
  %s5 = inlined_call_operand.hbm [shape: f32[2,1,4], index: 5, kind: output, shape index: {}]
  %s6 = sld [smem:[#allocation0]]
  $region73: #{tpu_custom_call.1} parent=0
    _
  %s8 = ssub.s32 1, %s6
  %s9 = scalar_select 0, %s8, %s6
  $region1: #{tpu_custom_call.1} parent=0
    #allocation3 [shape = 'u8[512]{0}', space=smem, size = 0x200, scoped, tag = 'input window, operand 0, single buffered']
    #allocation4 [shape = 's32[2]{0}', space=sflag, size = 0x8, scoped, tag = 'scoped memory for tpu_custom_call.1']
    #allocation5 [shape = 's32[2]{0}', space=sflag, size = 0x8, scoped, tag = 'scoped memory for tpu_custom_call.1']
    #allocation6 [shape = 's32[2]{0}', space=sflag, size = 0x8, scoped, tag = 'scoped memory for tpu_custom_call.1']
    #allocation7 [shape = 'u8[4096]{0}', space=vmem, size = 0x1000, scoped, tag = 'input window, operand 1, single buffered']
    #allocation8 [shape = 'u8[32768]{0}', space=vmem, size = 0x8000, scoped, tag = 'input window, operand 2, single buffered']
    #allocation9 [shape = 's32[1]{0}', space=sflag, size = 0x4, scoped, tag = 'scoped memory for tpu_custom_call.1']
    #allocation10 [shape = 'u8[65536]{0}', space=vmem, size = 0x10000, scoped, tag = 'input window, operand 3']
    #allocation11 [shape = 'u8[65536]{0}', space=vmem, size = 0x10000, scoped, tag = 'input window, operand 4']
    #allocation12 [shape = 'u8[1024]{0}', space=vmem, size = 0x400, scoped, tag = 'output window, operand 0']
    %10 = vsyncpa [#allocation6], 0
    %11 = vsyncpa [#allocation4], 0
    %12 = vsyncpa [#allocation9], 0
    %13 = vsyncpa [#allocation5], 0
    %s14 = scalar_lea.sflag [#allocation5], 1
    %15 = vsyncpa %s14, 0
    loop: start=0, step=1, limit=4
    $region2: #{tpu_custom_call.1} parent=1 // loop_pre_header
      _
    $region3: #{tpu_custom_call.1} parent=1 // loop_header
      %s17 = sphi 0, %s21
      %p18 = scmp.ge.s32.totalorder %s17, 4
      %s25 = sphi 0, %s25
      %s27 = sphi 0, %s25
      %s28 = sphi 0, %s27
      %s42 = sphi 0, %s28
      %s46 = sphi 0, %s46
      %s48 = sphi 0, %s46
      %s49 = sphi 0, %s48
      %s63 = sphi 0, %s49
      %s67 = sphi 0, %s67
      %s69 = sphi 0, %s67
      %s70 = sphi 0, %s69
      %s84 = sphi 0, %s70
      %s90 = sphi 0, %s92
      %s93 = sphi 0, %s90
      %s94 = sphi 0, %s93
      %s110 = sphi 0, %s94
      %s116 = sphi 0, %s118
      %s119 = sphi 0, %s116
      %s120 = sphi 0, %s119
      %s136 = sphi 0, %s120
      %s142 = sphi 0, %s144
      %s145 = sphi 0, %s142
      %s146 = sphi 0, %s145
      %s162 = sphi 0, %s146
    $region4: #{tpu_custom_call.1} parent=1 // loop_header_branch
      %20 = sbr.rel (%p18) target = $region8
    $region5: #{tpu_custom_call.1} parent=1 // loop_body
      %s22 = ssub.s32 %s17, 1
      %s23 = ssub.s32 %s17, 2
      %s24 = sadd.s32 %s17, 1
      %s26 = sadd.s32 %s25, 1
      %p29 = scmp.eq.s32.totalorder %s17, 1
      %p30 = scmp.ne.s32.totalorder %s25, %s27
      %p31 = scmp.eq.s32.totalorder %s17, 0
      %p32 = por %p30, %p31
      %p33 = scmp.ne.s32.totalorder %s25, %s27
      %p34 = scmp.eq.s32.totalorder %s22, 1
      %p35 = por %p33, %p34
      %p36 = scmp.ne.s32.totalorder %s27, %s28
      %p37 = scmp.eq.s32.totalorder %s22, 0
      %p38 = por %p36, %p37
      %p39 = scmp.ne.s32.totalorder %s27, %s28
      %p40 = scmp.eq.s32.totalorder %s23, 1
      %p41 = por %p39, %p40
      %p43 = scmp.ne.s32.totalorder %s28, %s42
      %p44 = scmp.eq.s32.totalorder %s23, 0
      %p45 = por %p43, %p44
      %s47 = sadd.s32 %s46, 1
      %p50 = scmp.eq.s32.totalorder %s17, 1
      %p51 = scmp.ne.s32.totalorder %s46, %s48
      %p52 = scmp.eq.s32.totalorder %s17, 0
      %p53 = por %p51, %p52
      %p54 = scmp.ne.s32.totalorder %s46, %s48
      %p55 = scmp.eq.s32.totalorder %s22, 1
      %p56 = por %p54, %p55
      %p57 = scmp.ne.s32.totalorder %s48, %s49
      %p58 = scmp.eq.s32.totalorder %s22, 0
      %p59 = por %p57, %p58
      %p60 = scmp.ne.s32.totalorder %s48, %s49
      %p61 = scmp.eq.s32.totalorder %s23, 1
      %p62 = por %p60, %p61
      %p64 = scmp.ne.s32.totalorder %s49, %s63
      %p65 = scmp.eq.s32.totalorder %s23, 0
      %p66 = por %p64, %p65
      %s68 = sadd.s32 %s67, 1
      %p71 = scmp.eq.s32.totalorder %s17, 1
      %p72 = scmp.ne.s32.totalorder %s67, %s69
      %p73 = scmp.eq.s32.totalorder %s17, 0
      %p74 = por %p72, %p73
      %p75 = scmp.ne.s32.totalorder %s67, %s69
      %p76 = scmp.eq.s32.totalorder %s22, 1
      %p77 = por %p75, %p76
      %p78 = scmp.ne.s32.totalorder %s69, %s70
      %p79 = scmp.eq.s32.totalorder %s22, 0
      %p80 = por %p78, %p79
      %p81 = scmp.ne.s32.totalorder %s69, %s70
      %p82 = scmp.eq.s32.totalorder %s23, 1
      %p83 = por %p81, %p82
      %p85 = scmp.ne.s32.totalorder %s70, %s84
      %p86 = scmp.eq.s32.totalorder %s23, 0
      %p87 = por %p85, %p86
      %s88 = ssub.s32 %s17, %s24
      %p89 = scmp.eq.s32.totalorder %s88, 0
      %s91 = sadd.s32 %s90, 1
      %s92 = scalar_select %p89, %s90, %s91
      %p95 = pneg %p89
      %p96 = scmp.eq.s32.totalorder %s17, 1
      %p97 = por %p95, %p96
      %p98 = scmp.ne.s32.totalorder %s90, %s93
      %p99 = scmp.eq.s32.totalorder %s17, 0
      %p100 = por %p98, %p99
      %p101 = scmp.ne.s32.totalorder %s90, %s93
      %p102 = scmp.eq.s32.totalorder %s22, 1
      %p103 = por %p101, %p102
      %p104 = scmp.ne.s32.totalorder %s93, %s94
      %p105 = scmp.eq.s32.totalorder %s22, 0
      %p106 = por %p104, %p105
      %p107 = scmp.ne.s32.totalorder %s93, %s94
      %p108 = scmp.eq.s32.totalorder %s23, 1
      %p109 = por %p107, %p108
      %p111 = scmp.ne.s32.totalorder %s94, %s110
      %p112 = scmp.eq.s32.totalorder %s23, 0
      %p113 = por %p111, %p112
      %s114 = ssub.s32 %s17, %s24
      %p115 = scmp.eq.s32.totalorder %s114, 0
      %s117 = sadd.s32 %s116, 1
      %s118 = scalar_select %p115, %s116, %s117
      %p121 = pneg %p115
      %p122 = scmp.eq.s32.totalorder %s17, 1
      %p123 = por %p121, %p122
      %p124 = scmp.ne.s32.totalorder %s116, %s119
      %p125 = scmp.eq.s32.totalorder %s17, 0
      %p126 = por %p124, %p125
      %p127 = scmp.ne.s32.totalorder %s116, %s119
      %p128 = scmp.eq.s32.totalorder %s22, 1
      %p129 = por %p127, %p128
      %p130 = scmp.ne.s32.totalorder %s119, %s120
      %p131 = scmp.eq.s32.totalorder %s22, 0
      %p132 = por %p130, %p131
      %p133 = scmp.ne.s32.totalorder %s119, %s120
      %p134 = scmp.eq.s32.totalorder %s23, 1
      %p135 = por %p133, %p134
      %p137 = scmp.ne.s32.totalorder %s120, %s136
      %p138 = scmp.eq.s32.totalorder %s23, 0
      %p139 = por %p137, %p138
      %s140 = ssub.s32 %s17, %s24
      %p141 = scmp.eq.s32.totalorder %s140, 0
      %s143 = sadd.s32 %s142, 1
      %s144 = scalar_select %p141, %s142, %s143
      %p147 = pneg %p141
      %p148 = scmp.eq.s32.totalorder %s17, 1
      %p149 = por %p147, %p148
      %p150 = scmp.ne.s32.totalorder %s142, %s145
      %p151 = scmp.eq.s32.totalorder %s17, 0
      %p152 = por %p150, %p151
      %p153 = scmp.ne.s32.totalorder %s142, %s145
      %p154 = scmp.eq.s32.totalorder %s22, 1
      %p155 = por %p153, %p154
      %p156 = scmp.ne.s32.totalorder %s145, %s146
      %p157 = scmp.eq.s32.totalorder %s22, 0
      %p158 = por %p156, %p157
      %p159 = scmp.ne.s32.totalorder %s145, %s146
      %p160 = scmp.eq.s32.totalorder %s23, 1
      %p161 = por %p159, %p160
      %p163 = scmp.ne.s32.totalorder %s146, %s162
      %p164 = scmp.eq.s32.totalorder %s23, 0
      %p165 = por %p163, %p164
      %p166 = scmp.le.s32.totalorder 1, %s17
      %p167 = scmp.lt.s32.totalorder %s17, 3
      %p168 = pnand %p166, %p167
      %p169 = pneg %p168
      // Predicated region
      $region9: #{tpu_custom_call.1} parent=5 // pred_check
        _
      $region10: #{tpu_custom_call.1} parent=5 // pred_check_branch
        %171 = sbr.rel (%p168) target = $region12
      $region11: #{tpu_custom_call.1} parent=5 // pred_region
        %s172 = ssub.s32 %s17, 1
        // Predicated region
        $region13: #{tpu_custom_call.1} parent=11 // pred_check
          %p173 = pneg %p38
        $region14: #{tpu_custom_call.1} parent=11 // pred_check_branch
          %175 = sbr.rel (%p173) target = $region16
        $region15: #{tpu_custom_call.1} parent=11 // pred_region
          %s177 = ssub.s32 16, 16
          %178 = vsyncadd [#allocation6], %s177
          %181 = dma.hbm_to_smem %s0, 16, [#allocation3], [#allocation6]
        $region16: #{tpu_custom_call.1} parent=11 // pred_fallthru
          _
        // Predicated region
        $region17: #{tpu_custom_call.1} parent=11 // pred_check
          %p182 = pneg %p59
        $region18: #{tpu_custom_call.1} parent=11 // pred_check_branch
          %184 = sbr.rel (%p182) target = $region20
        $region19: #{tpu_custom_call.1} parent=11 // pred_region
          %s186 = ssub.s32 128, 128
          %187 = vsyncadd [#allocation4], %s186
          %s188 = sshll.u32 [#allocation7], 4
          %s189 = int_to_ptr.vmem [resolvable:$true] %s188
          %194 = dma.hbm_to_vmem [thread:$0]  %s1, 128, %s189, [#allocation4], 64, 64, 4
        $region20: #{tpu_custom_call.1} parent=11 // pred_fallthru
          _
        // Predicated region
        $region21: #{tpu_custom_call.1} parent=11 // pred_check
          %p195 = pneg %p80
        $region22: #{tpu_custom_call.1} parent=11 // pred_check_branch
          %197 = sbr.rel (%p195) target = $region24
        $region23: #{tpu_custom_call.1} parent=11 // pred_region
          %s199 = ssub.s32 1024, 1024
          %200 = vsyncadd [#allocation9], %s199
          %s201 = sshll.u32 [#allocation8], 4
          %s202 = int_to_ptr.vmem [resolvable:$true] %s201
          %207 = dma.hbm_to_vmem [thread:$0]  %s2, 1024, %s202, [#allocation9], 64, 64, 4
        $region24: #{tpu_custom_call.1} parent=11 // pred_fallthru
          _
      $region12: #{tpu_custom_call.1} parent=5 // pred_fallthru
        _
      %p208 = scmp.lt.s32.totalorder %s17, 2
      // Predicated region
      $region25: #{tpu_custom_call.1} parent=5 // pred_check
        %p209 = pneg %p208
      $region26: #{tpu_custom_call.1} parent=5 // pred_check_branch
        %211 = sbr.rel (%p209) target = $region28
      $region27: #{tpu_custom_call.1} parent=5 // pred_region
        // Predicated region
        $region29: #{tpu_custom_call.1} parent=27 // pred_check
          %p212 = pneg %p100
        $region30: #{tpu_custom_call.1} parent=27 // pred_check_branch
          %214 = sbr.rel (%p212) target = $region32
        $region31: #{tpu_custom_call.1} parent=27 // pred_region
          %s215 = sand.u32 %s17, 1
          %s216 = scalar_lea.sflag [#allocation4], %s215
          %s217 = sand.u32 %s90, 1
          %s218 = smul.addr %s217, 64
          %s219 = scalar_lea.vmem [#allocation10], %s218
          %s220 = smul.u32 4, %s17
          %s222 = ssub.s32 1024, 1024
          %223 = vsyncadd %s216, %s222
          %s224 = smul.addr %s220, 2
          %s225 = smul.addr %s224, 128
          %s226 = scalar_lea.hbm %s3, %s225
          %s227 = sshll.u32 %s219, 4
          %s228 = int_to_ptr.vmem [resolvable:$true] %s227
          %233 = dma.hbm_to_vmem [thread:$0]  %s226, 1024, %s228, %s216, 128, 128, 8
        $region32: #{tpu_custom_call.1} parent=27 // pred_fallthru
          _
        // Predicated region
        $region33: #{tpu_custom_call.1} parent=27 // pred_check
          %p234 = pneg %p126
        $region34: #{tpu_custom_call.1} parent=27 // pred_check_branch
          %236 = sbr.rel (%p234) target = $region36
        $region35: #{tpu_custom_call.1} parent=27 // pred_region
          %s237 = sand.u32 %s17, 1
          %s238 = scalar_lea.sflag [#allocation4], %s237
          %s239 = sand.u32 %s116, 1
          %s240 = smul.addr %s239, 64
          %s241 = scalar_lea.vmem [#allocation11], %s240
          %s242 = smul.u32 4, %s17
          %s244 = ssub.s32 1024, 1024
          %245 = vsyncadd %s238, %s244
          %s246 = smul.addr %s242, 2
          %s247 = smul.addr %s246, 128
          %s248 = scalar_lea.hbm %s4, %s247
          %s249 = sshll.u32 %s241, 4
          %s250 = int_to_ptr.vmem [resolvable:$true] %s249
          %255 = dma.hbm_to_vmem [thread:$0]  %s248, 1024, %s250, %s238, 128, 128, 8
        $region36: #{tpu_custom_call.1} parent=27 // pred_fallthru
          _
      $region28: #{tpu_custom_call.1} parent=5 // pred_fallthru
        _
      %p256 = scmp.le.s32.totalorder 1, %s17
      %p257 = scmp.lt.s32.totalorder %s17, 3
      %p258 = pnand %p256, %p257
      %p259 = pneg %p258
      // Predicated region
      $region37: #{tpu_custom_call.1} parent=5 // pred_check
        _
      $region38: #{tpu_custom_call.1} parent=5 // pred_check_branch
        %261 = sbr.rel (%p258) target = $region40
      $region39: #{tpu_custom_call.1} parent=5 // pred_region
        %s262 = ssub.s32 %s17, 1
        // Predicated region
        $region41: #{tpu_custom_call.1} parent=39 // pred_check
          %p263 = pneg %p38
        $region42: #{tpu_custom_call.1} parent=39 // pred_check_branch
          %265 = sbr.rel (%p263) target = $region44
        $region43: #{tpu_custom_call.1} parent=39 // pred_region
          %266 = dma.done [#allocation6], 16
        $region44: #{tpu_custom_call.1} parent=39 // pred_fallthru
          _
        // Predicated region
        $region45: #{tpu_custom_call.1} parent=39 // pred_check
          %p267 = pneg %p59
        $region46: #{tpu_custom_call.1} parent=39 // pred_check_branch
          %269 = sbr.rel (%p267) target = $region48
        $region47: #{tpu_custom_call.1} parent=39 // pred_region
          %270 = dma.done [#allocation4], 128
        $region48: #{tpu_custom_call.1} parent=39 // pred_fallthru
          _
        // Predicated region
        $region49: #{tpu_custom_call.1} parent=39 // pred_check
          %p271 = pneg %p80
        $region50: #{tpu_custom_call.1} parent=39 // pred_check_branch
          %273 = sbr.rel (%p271) target = $region52
        $region51: #{tpu_custom_call.1} parent=39 // pred_region
          %274 = dma.done [#allocation9], 1024
        $region52: #{tpu_custom_call.1} parent=39 // pred_fallthru
          _
        %s275 = sand.u32 %s22, 1
        %s276 = scalar_lea.sflag [#allocation4], %s275
        %s277 = sand.u32 %s93, 1
        %s278 = smul.addr %s277, 64
        %s279 = scalar_lea.vmem [#allocation10], %s278
        // Predicated region
        $region53: #{tpu_custom_call.1} parent=39 // pred_check
          %p280 = pneg %p106
        $region54: #{tpu_custom_call.1} parent=39 // pred_check_branch
          %282 = sbr.rel (%p280) target = $region56
        $region55: #{tpu_custom_call.1} parent=39 // pred_region
          %283 = dma.done %s276, 1024
        $region56: #{tpu_custom_call.1} parent=39 // pred_fallthru
          _
        %s284 = sand.u32 %s22, 1
        %s285 = scalar_lea.sflag [#allocation4], %s284
        %s286 = sand.u32 %s119, 1
        %s287 = smul.addr %s286, 64
        %s288 = scalar_lea.vmem [#allocation11], %s287
        // Predicated region
        $region57: #{tpu_custom_call.1} parent=39 // pred_check
          %p289 = pneg %p132
        $region58: #{tpu_custom_call.1} parent=39 // pred_check_branch
          %291 = sbr.rel (%p289) target = $region60
        $region59: #{tpu_custom_call.1} parent=39 // pred_region
          %292 = dma.done %s285, 1024
        $region60: #{tpu_custom_call.1} parent=39 // pred_fallthru
          _
        %293 = sfence
        %p294 = pneg %p38
        %p295 = pneg %p35
        %p296 = pneg %p59
        %p297 = pneg %p56
        %p298 = pneg %p80
        %p299 = pneg %p77
        %s300 = sand.u32 %s22, 1
        %s301 = scalar_lea.sflag [#allocation4], %s300
        %s302 = sand.u32 %s93, 1
        %s303 = smul.addr %s302, 64
        %s304 = scalar_lea.vmem [#allocation10], %s303
        %p305 = pneg %p106
        %p306 = pneg %p103
        %s307 = sand.u32 %s22, 1
        %s308 = scalar_lea.sflag [#allocation4], %s307
        %s309 = sand.u32 %s119, 1
        %s310 = smul.addr %s309, 64
        %s311 = scalar_lea.vmem [#allocation11], %s310
        %p312 = pneg %p132
        %p313 = pneg %p129
        %p314 = pneg %p158
        %p315 = pneg %p155
        %s316 = sand.u32 %s145, 1
        %s317 = scalar_lea.sflag [#allocation5], %s316
        %s318 = sand.u32 %s145, 1
        %s319 = scalar_lea.vmem [#allocation12], %s318
        %s320 = smul.u32 4, %s22
        %s321 = smul.u32 4, %s22
        %s323 = sld [smem:[#allocation3]]
        %s324 = sld [smem:[#allocation3 + $0x1]]
        %v325 = vld [vmem:[#allocation7] sm:$0xf]
        %v326 = vld [vmem:[#allocation7 + $0x4] sm:$0xf]
        %v327 = vld [vmem:[#allocation8] sm:$0xf]
        %v328 = vld [vmem:[#allocation8 + $0x4] sm:$0xf]
        %v329 = vld [vmem:[#allocation8 + $0x8] sm:$0xf]
        %v330 = vld [vmem:[#allocation8 + $0xc] sm:$0xf]
        %v331 = vld [vmem:[#allocation8 + $0x10] sm:$0xf]
        %v332 = vld [vmem:[#allocation8 + $0x14] sm:$0xf]
        %v333 = vld [vmem:[#allocation8 + $0x18] sm:$0xf]
        %v334 = vld [vmem:[#allocation8 + $0x1c] sm:$0xf]
        %v335 = vld [vmem:[#allocation8 + $0x20] sm:$0xf]
        %v336 = vld [vmem:[#allocation8 + $0x24] sm:$0xf]
        %v337 = vld [vmem:[#allocation8 + $0x28] sm:$0xf]
        %v338 = vld [vmem:[#allocation8 + $0x2c] sm:$0xf]
        %v339 = vld [vmem:[#allocation8 + $0x30] sm:$0xf]
        %v340 = vld [vmem:[#allocation8 + $0x34] sm:$0xf]
        %v341 = vld [vmem:[#allocation8 + $0x38] sm:$0xf]
        %v342 = vld [vmem:[#allocation8 + $0x3c] sm:$0xf]
        %v343 = vld [vmem:[%s279] sm:$0xff]
        %v344 = vld [vmem:[%s279 + $0x8] sm:$0xff]
        %v345 = vld [vmem:[%s288] sm:$0xff]
        %v346 = vld [vmem:[%s288 + $0x8] sm:$0xff]
        %v347 = vpack.c.bf16 %v344, %v343
        %v348 = vpack.c.bf16 %v346, %v345
        %v349 = vmul.f32 %v343, %v343
        %v350 = vmul.f32 %v344, %v344
        %v351 = vpack.c.bf16 %v350, %v349
        %v352 = vmul.f32 %v345, %v345
        %v353 = vmul.f32 %v346, %v346
        %v354 = vpack.c.bf16 %v353, %v352
        %v355 = vmul.f32 %v343, %v345
        %v356 = vmul.f32 %v344, %v346
        %v357 = vpack.c.bf16 %v356, %v355
        %v360 = vunpack.c.l.b16 %v325
        %v361 = vunpack.c.l.b16 %v326
        %v362 = vpack.c.b16 %v361, %v360
        %vm363 = vcmask 130048
        %v365 = vsel %vm363, %v362, 0
        %367 = vmatprep.subr.bf16.mxu0 0
        %368 = vmatpush1.bf16.msra.mxu0 0
        %369 = vmatprep.subr.bf16.mxu0 0
        %370 = vmatpush1.bf16.msra.mxu0 0
        %371 = vmatprep.subr.bf16.mxu0 0
        %372 = vmatpush1.bf16.msra.mxu0 0
        %373 = vmatprep.subr.bf16.mxu0 0
        %374 = vmatpush1.bf16.msra.mxu0 0
        %375 = vmatprep.subr.bf16.mxu0 0
        %376 = vmatpush1.bf16.msra.mxu0 0
        %377 = vmatprep.subr.bf16.mxu0 0
        %378 = vmatpush1.bf16.msra.mxu0 0
        %379 = vmatprep.subr.bf16.mxu0 0
        %380 = vmatpush1.bf16.msra.mxu0 0
        %381 = vmatprep.subr.bf16.mxu0 %v348
        %382 = vmatpush1.bf16.msra.mxu0 %v347
        %383 = vmatprep.subr.bf16.mxu0 0
        %384 = vmatpush2.bf16.msra.mxu0 0
        %385 = vmatprep.subr.bf16.mxu0 0
        %386 = vmatpush2.bf16.msra.mxu0 0
        %387 = vmatprep.subr.bf16.mxu0 0
        %388 = vmatpush2.bf16.msra.mxu0 0
        %389 = vmatprep.subr.bf16.mxu0 0
        %390 = vmatpush2.bf16.msra.mxu0 0
        %391 = vmatprep.subr.bf16.mxu0 0
        %392 = vmatpush2.bf16.msra.mxu0 0
        %393 = vmatprep.subr.bf16.mxu0 0
        %394 = vmatpush2.bf16.msra.mxu0 0
        %395 = vmatprep.subr.bf16.mxu0 0
        %396 = vmatpush2.bf16.msra.mxu0 0
        %397 = vmatprep.subr.bf16.mxu0 0
        %398 = vmatpush2.bf16.msra.mxu0 0
        %399 = vmatprep.mubr.bf16.mxu0 0
        %400 = vmatmul.mubr.bf16.gmra.mxu0 %v365
        %v401 = vpop.f32.mrf.mxu0
        %v402 = vadd.f32 0.0, %v401
        %v403 = vpop.f32.mrf.mxu0
        %v404 = vadd.f32 0.0, %v403
        %v405 = vpop.f32.mrf.mxu0
        %v406 = vadd.f32 0.0, %v405
        %v407 = vpop.f32.mrf.mxu0
        %v408 = vadd.f32 0.0, %v407
        %409 = vdwg.mxu0
        %410 = vmatprep.subr.bf16.mxu0 0
        %411 = vmatpush1.bf16.msra.mxu0 0
        %412 = vmatprep.subr.bf16.mxu0 0
        %413 = vmatpush1.bf16.msra.mxu0 0
        %414 = vmatprep.subr.bf16.mxu0 0
        %415 = vmatpush1.bf16.msra.mxu0 0
        %416 = vmatprep.subr.bf16.mxu0 0
        %417 = vmatpush1.bf16.msra.mxu0 0
        %418 = vmatprep.subr.bf16.mxu0 0
        %419 = vmatpush1.bf16.msra.mxu0 0
        %420 = vmatprep.subr.bf16.mxu0 0
        %421 = vmatpush1.bf16.msra.mxu0 0
        %422 = vmatprep.subr.bf16.mxu0 0
        %423 = vmatpush1.bf16.msra.mxu0 0
        %424 = vmatprep.subr.bf16.mxu0 %v354
        %425 = vmatpush1.bf16.msra.mxu0 %v351
        %426 = vmatprep.subr.bf16.mxu0 0
        %427 = vmatpush2.bf16.msra.mxu0 0
        %428 = vmatprep.subr.bf16.mxu0 0
        %429 = vmatpush2.bf16.msra.mxu0 0
        %430 = vmatprep.subr.bf16.mxu0 0
        %431 = vmatpush2.bf16.msra.mxu0 0
        %432 = vmatprep.subr.bf16.mxu0 0
        %433 = vmatpush2.bf16.msra.mxu0 0
        %434 = vmatprep.subr.bf16.mxu0 0
        %435 = vmatpush2.bf16.msra.mxu0 0
        %436 = vmatprep.subr.bf16.mxu0 0
        %437 = vmatpush2.bf16.msra.mxu0 0
        %438 = vmatprep.subr.bf16.mxu0 0
        %439 = vmatpush2.bf16.msra.mxu0 0
        %440 = vmatprep.subr.bf16.mxu0 0
        %441 = vmatpush2.bf16.msra.mxu0 0
        %442 = vmatprep.mubr.bf16.mxu0 0
        %443 = vmatmul.mubr.bf16.gmra.mxu0 %v365
        %v444 = vpop.f32.mrf.mxu0
        %v445 = vadd.f32 0.0, %v444
        %v446 = vpop.f32.mrf.mxu0
        %v447 = vadd.f32 0.0, %v446
        %v448 = vpop.f32.mrf.mxu0
        %v449 = vadd.f32 0.0, %v448
        %v450 = vpop.f32.mrf.mxu0
        %v451 = vadd.f32 0.0, %v450
        %452 = vdwg.mxu0
        %453 = vmatprep.subr.bf16.mxu0 0
        %454 = vmatpush1.bf16.msra.mxu0 0
        %455 = vmatprep.subr.bf16.mxu0 0
        %456 = vmatpush1.bf16.msra.mxu0 0
        %457 = vmatprep.subr.bf16.mxu0 0
        %458 = vmatpush1.bf16.msra.mxu0 0
        %459 = vmatprep.subr.bf16.mxu0 0
        %460 = vmatpush1.bf16.msra.mxu0 0
        %461 = vmatprep.subr.bf16.mxu0 0
        %462 = vmatpush1.bf16.msra.mxu0 0
        %463 = vmatprep.subr.bf16.mxu0 0
        %464 = vmatpush1.bf16.msra.mxu0 0
        %465 = vmatprep.subr.bf16.mxu0 0
        %466 = vmatpush1.bf16.msra.mxu0 0
        %467 = vmatprep.subr.bf16.mxu0 0
        %468 = vmatpush1.bf16.msra.mxu0 %v357
        %469 = vmatprep.subr.bf16.mxu0 0
        %470 = vmatpush2.bf16.msra.mxu0 0
        %471 = vmatprep.subr.bf16.mxu0 0
        %472 = vmatpush2.bf16.msra.mxu0 0
        %473 = vmatprep.subr.bf16.mxu0 0
        %474 = vmatpush2.bf16.msra.mxu0 0
        %475 = vmatprep.subr.bf16.mxu0 0
        %476 = vmatpush2.bf16.msra.mxu0 0
        %477 = vmatprep.subr.bf16.mxu0 0
        %478 = vmatpush2.bf16.msra.mxu0 0
        %479 = vmatprep.subr.bf16.mxu0 0
        %480 = vmatpush2.bf16.msra.mxu0 0
        %481 = vmatprep.subr.bf16.mxu0 0
        %482 = vmatpush2.bf16.msra.mxu0 0
        %483 = vmatprep.subr.bf16.mxu0 0
        %484 = vmatpush2.bf16.msra.mxu0 0
        %485 = vmatprep.mubr.bf16.mxu0 0
        %486 = vmatmul.mubr.bf16.gmra.mxu0 %v365
        %v487 = vpop.f32.mrf.mxu0
        %v488 = vadd.f32 0.0, %v487
        %v489 = vpop.f32.mrf.mxu0
        %v490 = vpop.f32.mrf.mxu0
        %v491 = vadd.f32 0.0, %v490
        %v492 = vpop.f32.mrf.mxu0
        %493 = vdwg.mxu0
        %v494 = vpack.c.bf16 %v406, %v402
        %v495 = vpack.c.bf16 %v408, %v404
        %v496 = vpack.c.bf16 %v449, %v445
        %v497 = vpack.c.bf16 %v451, %v447
        %v498 = vpack.c.bf16 %v491, %v488
        %v504 = vunpack.c.l.b16 %v494
        %v505 = vunpack.c.l.b16 %v495
        %v506 = vunpack.c.l.b16 %v496
        %v507 = vunpack.c.l.b16 %v497
        %v508 = vunpack.c.l.b16 %v498
        %v509 = vunpack.c.h.b16 %v494
        %v510 = vunpack.c.h.b16 %v495
        %v511 = vunpack.c.h.b16 %v496
        %v512 = vunpack.c.h.b16 %v497
        %v513 = vunpack.c.h.b16 %v498
        %v514 = vpack.c.b16 %v505, %v504
        %v515 = vpack.c.b16 %v507, %v506
        %v516 = vpack.c.b16 %v508, %v508
        %v517 = vpack.c.b16 %v510, %v509
        %v518 = vpack.c.b16 %v512, %v511
        %v519 = vpack.c.b16 %v513, %v513
        %526 = vst [vmem:[#allocation2] sm:$0xff] %v514
        %527 = vst [vmem:[#allocation2 + $0x8] sm:$0xff] %v515
        %528 = vst [vmem:[#allocation2 + $0x10] sm:$0xf] %v516
        %529 = vst [vmem:[#allocation2 + $0x14] sm:$0xff] %v517
        %530 = vst [vmem:[#allocation2 + $0x1c] sm:$0xff] %v518
        %531 = vst [vmem:[#allocation2 + $0x24] sm:$0xf] %v519
        %s532 = scalar_lea.vmem %s279, 16 [#allocation10]
        %v533 = vld [vmem:[%s532] sm:$0xff]
        %v534 = vld [vmem:[%s532 + $0x8] sm:$0xff]
        %s535 = scalar_lea.vmem %s288, 16 [#allocation11]
        %v536 = vld [vmem:[%s535] sm:$0xff]
        %v537 = vld [vmem:[%s535 + $0x8] sm:$0xff]
        %v538 = vpack.c.bf16 %v534, %v533
        %v539 = vpack.c.bf16 %v537, %v536
        %v540 = vmul.f32 %v533, %v533
        %v541 = vmul.f32 %v534, %v534
        %v542 = vpack.c.bf16 %v541, %v540
        %v543 = vmul.f32 %v536, %v536
        %v544 = vmul.f32 %v537, %v537
        %v545 = vpack.c.bf16 %v544, %v543
        %v546 = vmul.f32 %v533, %v536
        %v547 = vmul.f32 %v534, %v537
        %v548 = vpack.c.bf16 %v547, %v546
        %549 = vmatprep.subr.bf16.mxu0 0
        %550 = vmatpush1.bf16.msra.mxu0 0
        %551 = vmatprep.subr.bf16.mxu0 0
        %552 = vmatpush1.bf16.msra.mxu0 0
        %553 = vmatprep.subr.bf16.mxu0 0
        %554 = vmatpush1.bf16.msra.mxu0 0
        %555 = vmatprep.subr.bf16.mxu0 0
        %556 = vmatpush1.bf16.msra.mxu0 0
        %557 = vmatprep.subr.bf16.mxu0 0
        %558 = vmatpush1.bf16.msra.mxu0 0
        %559 = vmatprep.subr.bf16.mxu0 0
        %560 = vmatpush1.bf16.msra.mxu0 0
        %561 = vmatprep.subr.bf16.mxu0 0
        %562 = vmatpush1.bf16.msra.mxu0 0
        %563 = vmatprep.subr.bf16.mxu0 %v539
        %564 = vmatpush1.bf16.msra.mxu0 %v538
        %565 = vmatprep.subr.bf16.mxu0 0
        %566 = vmatpush2.bf16.msra.mxu0 0
        %567 = vmatprep.subr.bf16.mxu0 0
        %568 = vmatpush2.bf16.msra.mxu0 0
        %569 = vmatprep.subr.bf16.mxu0 0
        %570 = vmatpush2.bf16.msra.mxu0 0
        %571 = vmatprep.subr.bf16.mxu0 0
        %572 = vmatpush2.bf16.msra.mxu0 0
        %573 = vmatprep.subr.bf16.mxu0 0
        %574 = vmatpush2.bf16.msra.mxu0 0
        %575 = vmatprep.subr.bf16.mxu0 0
        %576 = vmatpush2.bf16.msra.mxu0 0
        %577 = vmatprep.subr.bf16.mxu0 0
        %578 = vmatpush2.bf16.msra.mxu0 0
        %579 = vmatprep.subr.bf16.mxu0 0
        %580 = vmatpush2.bf16.msra.mxu0 0
        %581 = vmatprep.mubr.bf16.mxu0 0
        %582 = vmatmul.mubr.bf16.gmra.mxu0 %v365
        %v583 = vpop.f32.mrf.mxu0
        %v584 = vadd.f32 0.0, %v583
        %v585 = vpop.f32.mrf.mxu0
        %v586 = vadd.f32 0.0, %v585
        %v587 = vpop.f32.mrf.mxu0
        %v588 = vadd.f32 0.0, %v587
        %v589 = vpop.f32.mrf.mxu0
        %v590 = vadd.f32 0.0, %v589
        %591 = vdwg.mxu0
        %592 = vmatprep.subr.bf16.mxu0 0
        %593 = vmatpush1.bf16.msra.mxu0 0
        %594 = vmatprep.subr.bf16.mxu0 0
        %595 = vmatpush1.bf16.msra.mxu0 0
        %596 = vmatprep.subr.bf16.mxu0 0
        %597 = vmatpush1.bf16.msra.mxu0 0
        %598 = vmatprep.subr.bf16.mxu0 0
        %599 = vmatpush1.bf16.msra.mxu0 0
        %600 = vmatprep.subr.bf16.mxu0 0
        %601 = vmatpush1.bf16.msra.mxu0 0
        %602 = vmatprep.subr.bf16.mxu0 0
        %603 = vmatpush1.bf16.msra.mxu0 0
        %604 = vmatprep.subr.bf16.mxu0 0
        %605 = vmatpush1.bf16.msra.mxu0 0
        %606 = vmatprep.subr.bf16.mxu0 %v545
        %607 = vmatpush1.bf16.msra.mxu0 %v542
        %608 = vmatprep.subr.bf16.mxu0 0
        %609 = vmatpush2.bf16.msra.mxu0 0
        %610 = vmatprep.subr.bf16.mxu0 0
        %611 = vmatpush2.bf16.msra.mxu0 0
        %612 = vmatprep.subr.bf16.mxu0 0
        %613 = vmatpush2.bf16.msra.mxu0 0
        %614 = vmatprep.subr.bf16.mxu0 0
        %615 = vmatpush2.bf16.msra.mxu0 0
        %616 = vmatprep.subr.bf16.mxu0 0
        %617 = vmatpush2.bf16.msra.mxu0 0
        %618 = vmatprep.subr.bf16.mxu0 0
        %619 = vmatpush2.bf16.msra.mxu0 0
        %620 = vmatprep.subr.bf16.mxu0 0
        %621 = vmatpush2.bf16.msra.mxu0 0
        %622 = vmatprep.subr.bf16.mxu0 0
        %623 = vmatpush2.bf16.msra.mxu0 0
        %624 = vmatprep.mubr.bf16.mxu0 0
        %625 = vmatmul.mubr.bf16.gmra.mxu0 %v365
        %v626 = vpop.f32.mrf.mxu0
        %v627 = vadd.f32 0.0, %v626
        %v628 = vpop.f32.mrf.mxu0
        %v629 = vadd.f32 0.0, %v628
        %v630 = vpop.f32.mrf.mxu0
        %v631 = vadd.f32 0.0, %v630
        %v632 = vpop.f32.mrf.mxu0
        %v633 = vadd.f32 0.0, %v632
        %634 = vdwg.mxu0
        %635 = vmatprep.subr.bf16.mxu0 0
        %636 = vmatpush1.bf16.msra.mxu0 0
        %637 = vmatprep.subr.bf16.mxu0 0
        %638 = vmatpush1.bf16.msra.mxu0 0
        %639 = vmatprep.subr.bf16.mxu0 0
        %640 = vmatpush1.bf16.msra.mxu0 0
        %641 = vmatprep.subr.bf16.mxu0 0
        %642 = vmatpush1.bf16.msra.mxu0 0
        %643 = vmatprep.subr.bf16.mxu0 0
        %644 = vmatpush1.bf16.msra.mxu0 0
        %645 = vmatprep.subr.bf16.mxu0 0
        %646 = vmatpush1.bf16.msra.mxu0 0
        %647 = vmatprep.subr.bf16.mxu0 0
        %648 = vmatpush1.bf16.msra.mxu0 0
        %649 = vmatprep.subr.bf16.mxu0 0
        %650 = vmatpush1.bf16.msra.mxu0 %v548
        %651 = vmatprep.subr.bf16.mxu0 0
        %652 = vmatpush2.bf16.msra.mxu0 0
        %653 = vmatprep.subr.bf16.mxu0 0
        %654 = vmatpush2.bf16.msra.mxu0 0
        %655 = vmatprep.subr.bf16.mxu0 0
        %656 = vmatpush2.bf16.msra.mxu0 0
        %657 = vmatprep.subr.bf16.mxu0 0
        %658 = vmatpush2.bf16.msra.mxu0 0
        %659 = vmatprep.subr.bf16.mxu0 0
        %660 = vmatpush2.bf16.msra.mxu0 0
        %661 = vmatprep.subr.bf16.mxu0 0
        %662 = vmatpush2.bf16.msra.mxu0 0
        %663 = vmatprep.subr.bf16.mxu0 0
        %664 = vmatpush2.bf16.msra.mxu0 0
        %665 = vmatprep.subr.bf16.mxu0 0
        %666 = vmatpush2.bf16.msra.mxu0 0
        %667 = vmatprep.mubr.bf16.mxu0 0
        %668 = vmatmul.mubr.bf16.gmra.mxu0 %v365
        %v669 = vpop.f32.mrf.mxu0
        %v670 = vadd.f32 0.0, %v669
        %v671 = vpop.f32.mrf.mxu0
        %v672 = vpop.f32.mrf.mxu0
        %v673 = vadd.f32 0.0, %v672
        %v674 = vpop.f32.mrf.mxu0
        %675 = vdwg.mxu0
        %v676 = vpack.c.bf16 %v588, %v584
        %v677 = vpack.c.bf16 %v590, %v586
        %v678 = vpack.c.bf16 %v631, %v627
        %v679 = vpack.c.bf16 %v633, %v629
        %v680 = vpack.c.bf16 %v673, %v670
        %v686 = vunpack.c.l.b16 %v676
        %v687 = vunpack.c.l.b16 %v677
        %v688 = vunpack.c.l.b16 %v678
        %v689 = vunpack.c.l.b16 %v679
        %v690 = vunpack.c.l.b16 %v680
        %v691 = vunpack.c.h.b16 %v676
        %v692 = vunpack.c.h.b16 %v677
        %v693 = vunpack.c.h.b16 %v678
        %v694 = vunpack.c.h.b16 %v679
        %v695 = vunpack.c.h.b16 %v680
        %v696 = vpack.c.b16 %v687, %v686
        %v697 = vpack.c.b16 %v689, %v688
        %v698 = vpack.c.b16 %v690, %v690
        %v699 = vpack.c.b16 %v692, %v691
        %v700 = vpack.c.b16 %v694, %v693
        %v701 = vpack.c.b16 %v695, %v695
        %s708 = scalar_lea.vmem [#allocation2], 40
        %709 = vst [vmem:[%s708] sm:$0xff] %v696
        %710 = vst [vmem:[%s708 + $0x8] sm:$0xff] %v697
        %711 = vst [vmem:[%s708 + $0x10] sm:$0xf] %v698
        %712 = vst [vmem:[%s708 + $0x14] sm:$0xff] %v699
        %713 = vst [vmem:[%s708 + $0x1c] sm:$0xff] %v700
        %714 = vst [vmem:[%s708 + $0x24] sm:$0xf] %v701
        %s715 = scalar_lea.vmem %s279, 32 [#allocation10]
        %v716 = vld [vmem:[%s715] sm:$0xff]
        %v717 = vld [vmem:[%s715 + $0x8] sm:$0xff]
        %s718 = scalar_lea.vmem %s288, 32 [#allocation11]
        %v719 = vld [vmem:[%s718] sm:$0xff]
        %v720 = vld [vmem:[%s718 + $0x8] sm:$0xff]
        %v721 = vpack.c.bf16 %v717, %v716
        %v722 = vpack.c.bf16 %v720, %v719
        %v723 = vmul.f32 %v716, %v716
        %v724 = vmul.f32 %v717, %v717
        %v725 = vpack.c.bf16 %v724, %v723
        %v726 = vmul.f32 %v719, %v719
        %v727 = vmul.f32 %v720, %v720
        %v728 = vpack.c.bf16 %v727, %v726
        %v729 = vmul.f32 %v716, %v719
        %v730 = vmul.f32 %v717, %v720
        %v731 = vpack.c.bf16 %v730, %v729
        %732 = vmatprep.subr.bf16.mxu0 0
        %733 = vmatpush1.bf16.msra.mxu0 0
        %734 = vmatprep.subr.bf16.mxu0 0
        %735 = vmatpush1.bf16.msra.mxu0 0
        %736 = vmatprep.subr.bf16.mxu0 0
        %737 = vmatpush1.bf16.msra.mxu0 0
        %738 = vmatprep.subr.bf16.mxu0 0
        %739 = vmatpush1.bf16.msra.mxu0 0
        %740 = vmatprep.subr.bf16.mxu0 0
        %741 = vmatpush1.bf16.msra.mxu0 0
        %742 = vmatprep.subr.bf16.mxu0 0
        %743 = vmatpush1.bf16.msra.mxu0 0
        %744 = vmatprep.subr.bf16.mxu0 0
        %745 = vmatpush1.bf16.msra.mxu0 0
        %746 = vmatprep.subr.bf16.mxu0 %v722
        %747 = vmatpush1.bf16.msra.mxu0 %v721
        %748 = vmatprep.subr.bf16.mxu0 0
        %749 = vmatpush2.bf16.msra.mxu0 0
        %750 = vmatprep.subr.bf16.mxu0 0
        %751 = vmatpush2.bf16.msra.mxu0 0
        %752 = vmatprep.subr.bf16.mxu0 0
        %753 = vmatpush2.bf16.msra.mxu0 0
        %754 = vmatprep.subr.bf16.mxu0 0
        %755 = vmatpush2.bf16.msra.mxu0 0
        %756 = vmatprep.subr.bf16.mxu0 0
        %757 = vmatpush2.bf16.msra.mxu0 0
        %758 = vmatprep.subr.bf16.mxu0 0
        %759 = vmatpush2.bf16.msra.mxu0 0
        %760 = vmatprep.subr.bf16.mxu0 0
        %761 = vmatpush2.bf16.msra.mxu0 0
        %762 = vmatprep.subr.bf16.mxu0 0
        %763 = vmatpush2.bf16.msra.mxu0 0
        %764 = vmatprep.mubr.bf16.mxu0 0
        %765 = vmatmul.mubr.bf16.gmra.mxu0 %v365
        %v766 = vpop.f32.mrf.mxu0
        %v767 = vadd.f32 0.0, %v766
        %v768 = vpop.f32.mrf.mxu0
        %v769 = vadd.f32 0.0, %v768
        %v770 = vpop.f32.mrf.mxu0
        %v771 = vadd.f32 0.0, %v770
        %v772 = vpop.f32.mrf.mxu0
        %v773 = vadd.f32 0.0, %v772
        %774 = vdwg.mxu0
        %775 = vmatprep.subr.bf16.mxu0 0
        %776 = vmatpush1.bf16.msra.mxu0 0
        %777 = vmatprep.subr.bf16.mxu0 0
        %778 = vmatpush1.bf16.msra.mxu0 0
        %779 = vmatprep.subr.bf16.mxu0 0
        %780 = vmatpush1.bf16.msra.mxu0 0
        %781 = vmatprep.subr.bf16.mxu0 0
        %782 = vmatpush1.bf16.msra.mxu0 0
        %783 = vmatprep.subr.bf16.mxu0 0
        %784 = vmatpush1.bf16.msra.mxu0 0
        %785 = vmatprep.subr.bf16.mxu0 0
        %786 = vmatpush1.bf16.msra.mxu0 0
        %787 = vmatprep.subr.bf16.mxu0 0
        %788 = vmatpush1.bf16.msra.mxu0 0
        %789 = vmatprep.subr.bf16.mxu0 %v728
        %790 = vmatpush1.bf16.msra.mxu0 %v725
        %791 = vmatprep.subr.bf16.mxu0 0
        %792 = vmatpush2.bf16.msra.mxu0 0
        %793 = vmatprep.subr.bf16.mxu0 0
        %794 = vmatpush2.bf16.msra.mxu0 0
        %795 = vmatprep.subr.bf16.mxu0 0
        %796 = vmatpush2.bf16.msra.mxu0 0
        %797 = vmatprep.subr.bf16.mxu0 0
        %798 = vmatpush2.bf16.msra.mxu0 0
        %799 = vmatprep.subr.bf16.mxu0 0
        %800 = vmatpush2.bf16.msra.mxu0 0
        %801 = vmatprep.subr.bf16.mxu0 0
        %802 = vmatpush2.bf16.msra.mxu0 0
        %803 = vmatprep.subr.bf16.mxu0 0
        %804 = vmatpush2.bf16.msra.mxu0 0
        %805 = vmatprep.subr.bf16.mxu0 0
        %806 = vmatpush2.bf16.msra.mxu0 0
        %807 = vmatprep.mubr.bf16.mxu0 0
        %808 = vmatmul.mubr.bf16.gmra.mxu0 %v365
        %v809 = vpop.f32.mrf.mxu0
        %v810 = vadd.f32 0.0, %v809
        %v811 = vpop.f32.mrf.mxu0
        %v812 = vadd.f32 0.0, %v811
        %v813 = vpop.f32.mrf.mxu0
        %v814 = vadd.f32 0.0, %v813
        %v815 = vpop.f32.mrf.mxu0
        %v816 = vadd.f32 0.0, %v815
        %817 = vdwg.mxu0
        %818 = vmatprep.subr.bf16.mxu0 0
        %819 = vmatpush1.bf16.msra.mxu0 0
        %820 = vmatprep.subr.bf16.mxu0 0
        %821 = vmatpush1.bf16.msra.mxu0 0
        %822 = vmatprep.subr.bf16.mxu0 0
        %823 = vmatpush1.bf16.msra.mxu0 0
        %824 = vmatprep.subr.bf16.mxu0 0
        %825 = vmatpush1.bf16.msra.mxu0 0
        %826 = vmatprep.subr.bf16.mxu0 0
        %827 = vmatpush1.bf16.msra.mxu0 0
        %828 = vmatprep.subr.bf16.mxu0 0
        %829 = vmatpush1.bf16.msra.mxu0 0
        %830 = vmatprep.subr.bf16.mxu0 0
        %831 = vmatpush1.bf16.msra.mxu0 0
        %832 = vmatprep.subr.bf16.mxu0 0
        %833 = vmatpush1.bf16.msra.mxu0 %v731
        %834 = vmatprep.subr.bf16.mxu0 0
        %835 = vmatpush2.bf16.msra.mxu0 0
        %836 = vmatprep.subr.bf16.mxu0 0
        %837 = vmatpush2.bf16.msra.mxu0 0
        %838 = vmatprep.subr.bf16.mxu0 0
        %839 = vmatpush2.bf16.msra.mxu0 0
        %840 = vmatprep.subr.bf16.mxu0 0
        %841 = vmatpush2.bf16.msra.mxu0 0
        %842 = vmatprep.subr.bf16.mxu0 0
        %843 = vmatpush2.bf16.msra.mxu0 0
        %844 = vmatprep.subr.bf16.mxu0 0
        %845 = vmatpush2.bf16.msra.mxu0 0
        %846 = vmatprep.subr.bf16.mxu0 0
        %847 = vmatpush2.bf16.msra.mxu0 0
        %848 = vmatprep.subr.bf16.mxu0 0
        %849 = vmatpush2.bf16.msra.mxu0 0
        %850 = vmatprep.mubr.bf16.mxu0 0
        %851 = vmatmul.mubr.bf16.gmra.mxu0 %v365
        %v852 = vpop.f32.mrf.mxu0
        %v853 = vadd.f32 0.0, %v852
        %v854 = vpop.f32.mrf.mxu0
        %v855 = vpop.f32.mrf.mxu0
        %v856 = vadd.f32 0.0, %v855
        %v857 = vpop.f32.mrf.mxu0
        %858 = vdwg.mxu0
        %v859 = vpack.c.bf16 %v771, %v767
        %v860 = vpack.c.bf16 %v773, %v769
        %v861 = vpack.c.bf16 %v814, %v810
        %v862 = vpack.c.bf16 %v816, %v812
        %v863 = vpack.c.bf16 %v856, %v853
        %v869 = vunpack.c.l.b16 %v859
        %v870 = vunpack.c.l.b16 %v860
        %v871 = vunpack.c.l.b16 %v861
        %v872 = vunpack.c.l.b16 %v862
        %v873 = vunpack.c.l.b16 %v863
        %v874 = vunpack.c.h.b16 %v859
        %v875 = vunpack.c.h.b16 %v860
        %v876 = vunpack.c.h.b16 %v861
        %v877 = vunpack.c.h.b16 %v862
        %v878 = vunpack.c.h.b16 %v863
        %v879 = vpack.c.b16 %v870, %v869
        %v880 = vpack.c.b16 %v872, %v871
        %v881 = vpack.c.b16 %v873, %v873
        %v882 = vpack.c.b16 %v875, %v874
        %v883 = vpack.c.b16 %v877, %v876
        %v884 = vpack.c.b16 %v878, %v878
        %s891 = scalar_lea.vmem [#allocation2], 80
        %892 = vst [vmem:[%s891] sm:$0xff] %v879
        %893 = vst [vmem:[%s891 + $0x8] sm:$0xff] %v880
        %894 = vst [vmem:[%s891 + $0x10] sm:$0xf] %v881
        %895 = vst [vmem:[%s891 + $0x14] sm:$0xff] %v882
        %896 = vst [vmem:[%s891 + $0x1c] sm:$0xff] %v883
        %897 = vst [vmem:[%s891 + $0x24] sm:$0xf] %v884
        %s898 = scalar_lea.vmem %s279, 48 [#allocation10]
        %v899 = vld [vmem:[%s898] sm:$0xff]
        %v900 = vld [vmem:[%s898 + $0x8] sm:$0xff]
        %s901 = scalar_lea.vmem %s288, 48 [#allocation11]
        %v902 = vld [vmem:[%s901] sm:$0xff]
        %v903 = vld [vmem:[%s901 + $0x8] sm:$0xff]
        %v904 = vpack.c.bf16 %v900, %v899
        %v905 = vpack.c.bf16 %v903, %v902
        %v906 = vmul.f32 %v899, %v899
        %v907 = vmul.f32 %v900, %v900
        %v908 = vpack.c.bf16 %v907, %v906
        %v909 = vmul.f32 %v902, %v902
        %v910 = vmul.f32 %v903, %v903
        %v911 = vpack.c.bf16 %v910, %v909
        %v912 = vmul.f32 %v899, %v902
        %v913 = vmul.f32 %v900, %v903
        %v914 = vpack.c.bf16 %v913, %v912
        %915 = vmatprep.subr.bf16.mxu0 0
        %916 = vmatpush1.bf16.msra.mxu0 0
        %917 = vmatprep.subr.bf16.mxu0 0
        %918 = vmatpush1.bf16.msra.mxu0 0
        %919 = vmatprep.subr.bf16.mxu0 0
        %920 = vmatpush1.bf16.msra.mxu0 0
        %921 = vmatprep.subr.bf16.mxu0 0
        %922 = vmatpush1.bf16.msra.mxu0 0
        %923 = vmatprep.subr.bf16.mxu0 0
        %924 = vmatpush1.bf16.msra.mxu0 0
        %925 = vmatprep.subr.bf16.mxu0 0
        %926 = vmatpush1.bf16.msra.mxu0 0
        %927 = vmatprep.subr.bf16.mxu0 0
        %928 = vmatpush1.bf16.msra.mxu0 0
        %929 = vmatprep.subr.bf16.mxu0 %v905
        %930 = vmatpush1.bf16.msra.mxu0 %v904
        %931 = vmatprep.subr.bf16.mxu0 0
        %932 = vmatpush2.bf16.msra.mxu0 0
        %933 = vmatprep.subr.bf16.mxu0 0
        %934 = vmatpush2.bf16.msra.mxu0 0
        %935 = vmatprep.subr.bf16.mxu0 0
        %936 = vmatpush2.bf16.msra.mxu0 0
        %937 = vmatprep.subr.bf16.mxu0 0
        %938 = vmatpush2.bf16.msra.mxu0 0
        %939 = vmatprep.subr.bf16.mxu0 0
        %940 = vmatpush2.bf16.msra.mxu0 0
        %941 = vmatprep.subr.bf16.mxu0 0
        %942 = vmatpush2.bf16.msra.mxu0 0
        %943 = vmatprep.subr.bf16.mxu0 0
        %944 = vmatpush2.bf16.msra.mxu0 0
        %945 = vmatprep.subr.bf16.mxu0 0
        %946 = vmatpush2.bf16.msra.mxu0 0
        %947 = vmatprep.mubr.bf16.mxu0 0
        %948 = vmatmul.mubr.bf16.gmra.mxu0 %v365
        %v949 = vpop.f32.mrf.mxu0
        %v950 = vadd.f32 0.0, %v949
        %v951 = vpop.f32.mrf.mxu0
        %v952 = vadd.f32 0.0, %v951
        %v953 = vpop.f32.mrf.mxu0
        %v954 = vadd.f32 0.0, %v953
        %v955 = vpop.f32.mrf.mxu0
        %v956 = vadd.f32 0.0, %v955
        %957 = vdwg.mxu0
        %958 = vmatprep.subr.bf16.mxu0 0
        %959 = vmatpush1.bf16.msra.mxu0 0
        %960 = vmatprep.subr.bf16.mxu0 0
        %961 = vmatpush1.bf16.msra.mxu0 0
        %962 = vmatprep.subr.bf16.mxu0 0
        %963 = vmatpush1.bf16.msra.mxu0 0
        %964 = vmatprep.subr.bf16.mxu0 0
        %965 = vmatpush1.bf16.msra.mxu0 0
        %966 = vmatprep.subr.bf16.mxu0 0
        %967 = vmatpush1.bf16.msra.mxu0 0
        %968 = vmatprep.subr.bf16.mxu0 0
        %969 = vmatpush1.bf16.msra.mxu0 0
        %970 = vmatprep.subr.bf16.mxu0 0
        %971 = vmatpush1.bf16.msra.mxu0 0
        %972 = vmatprep.subr.bf16.mxu0 %v911
        %973 = vmatpush1.bf16.msra.mxu0 %v908
        %974 = vmatprep.subr.bf16.mxu0 0
        %975 = vmatpush2.bf16.msra.mxu0 0
        %976 = vmatprep.subr.bf16.mxu0 0
        %977 = vmatpush2.bf16.msra.mxu0 0
        %978 = vmatprep.subr.bf16.mxu0 0
        %979 = vmatpush2.bf16.msra.mxu0 0
        %980 = vmatprep.subr.bf16.mxu0 0
        %981 = vmatpush2.bf16.msra.mxu0 0
        %982 = vmatprep.subr.bf16.mxu0 0
        %983 = vmatpush2.bf16.msra.mxu0 0
        %984 = vmatprep.subr.bf16.mxu0 0
        %985 = vmatpush2.bf16.msra.mxu0 0
        %986 = vmatprep.subr.bf16.mxu0 0
        %987 = vmatpush2.bf16.msra.mxu0 0
        %988 = vmatprep.subr.bf16.mxu0 0
        %989 = vmatpush2.bf16.msra.mxu0 0
        %990 = vmatprep.mubr.bf16.mxu0 0
        %991 = vmatmul.mubr.bf16.gmra.mxu0 %v365
        %v992 = vpop.f32.mrf.mxu0
        %v993 = vadd.f32 0.0, %v992
        %v994 = vpop.f32.mrf.mxu0
        %v995 = vadd.f32 0.0, %v994
        %v996 = vpop.f32.mrf.mxu0
        %v997 = vadd.f32 0.0, %v996
        %v998 = vpop.f32.mrf.mxu0
        %v999 = vadd.f32 0.0, %v998
        %1000 = vdwg.mxu0
        %1001 = vmatprep.subr.bf16.mxu0 0
        %1002 = vmatpush1.bf16.msra.mxu0 0
        %1003 = vmatprep.subr.bf16.mxu0 0
        %1004 = vmatpush1.bf16.msra.mxu0 0
        %1005 = vmatprep.subr.bf16.mxu0 0
        %1006 = vmatpush1.bf16.msra.mxu0 0
        %1007 = vmatprep.subr.bf16.mxu0 0
        %1008 = vmatpush1.bf16.msra.mxu0 0
        %1009 = vmatprep.subr.bf16.mxu0 0
        %1010 = vmatpush1.bf16.msra.mxu0 0
        %1011 = vmatprep.subr.bf16.mxu0 0
        %1012 = vmatpush1.bf16.msra.mxu0 0
        %1013 = vmatprep.subr.bf16.mxu0 0
        %1014 = vmatpush1.bf16.msra.mxu0 0
        %1015 = vmatprep.subr.bf16.mxu0 0
        %1016 = vmatpush1.bf16.msra.mxu0 %v914
        %1017 = vmatprep.subr.bf16.mxu0 0
        %1018 = vmatpush2.bf16.msra.mxu0 0
        %1019 = vmatprep.subr.bf16.mxu0 0
        %1020 = vmatpush2.bf16.msra.mxu0 0
        %1021 = vmatprep.subr.bf16.mxu0 0
        %1022 = vmatpush2.bf16.msra.mxu0 0
        %1023 = vmatprep.subr.bf16.mxu0 0
        %1024 = vmatpush2.bf16.msra.mxu0 0
        %1025 = vmatprep.subr.bf16.mxu0 0
        %1026 = vmatpush2.bf16.msra.mxu0 0
        %1027 = vmatprep.subr.bf16.mxu0 0
        %1028 = vmatpush2.bf16.msra.mxu0 0
        %1029 = vmatprep.subr.bf16.mxu0 0
        %1030 = vmatpush2.bf16.msra.mxu0 0
        %1031 = vmatprep.subr.bf16.mxu0 0
        %1032 = vmatpush2.bf16.msra.mxu0 0
        %1033 = vmatprep.mubr.bf16.mxu0 0
        %1034 = vmatmul.mubr.bf16.gmra.mxu0 %v365
        %v1035 = vpop.f32.mrf.mxu0
        %v1036 = vadd.f32 0.0, %v1035
        %v1037 = vpop.f32.mrf.mxu0
        %v1038 = vpop.f32.mrf.mxu0
        %v1039 = vadd.f32 0.0, %v1038
        %v1040 = vpop.f32.mrf.mxu0
        %1041 = vdwg.mxu0
        %v1042 = vpack.c.bf16 %v954, %v950
        %v1043 = vpack.c.bf16 %v956, %v952
        %v1044 = vpack.c.bf16 %v997, %v993
        %v1045 = vpack.c.bf16 %v999, %v995
        %v1046 = vpack.c.bf16 %v1039, %v1036
        %v1052 = vunpack.c.l.b16 %v1042
        %v1053 = vunpack.c.l.b16 %v1043
        %v1054 = vunpack.c.l.b16 %v1044
        %v1055 = vunpack.c.l.b16 %v1045
        %v1056 = vunpack.c.l.b16 %v1046
        %v1057 = vunpack.c.h.b16 %v1042
        %v1058 = vunpack.c.h.b16 %v1043
        %v1059 = vunpack.c.h.b16 %v1044
        %v1060 = vunpack.c.h.b16 %v1045
        %v1061 = vunpack.c.h.b16 %v1046
        %v1062 = vpack.c.b16 %v1053, %v1052
        %v1063 = vpack.c.b16 %v1055, %v1054
        %v1064 = vpack.c.b16 %v1056, %v1056
        %v1065 = vpack.c.b16 %v1058, %v1057
        %v1066 = vpack.c.b16 %v1060, %v1059
        %v1067 = vpack.c.b16 %v1061, %v1061
        %s1074 = scalar_lea.vmem [#allocation2], 120
        %1075 = vst [vmem:[%s1074] sm:$0xff] %v1062
        %1076 = vst [vmem:[%s1074 + $0x8] sm:$0xff] %v1063
        %1077 = vst [vmem:[%s1074 + $0x10] sm:$0xf] %v1064
        %1078 = vst [vmem:[%s1074 + $0x14] sm:$0xff] %v1065
        %1079 = vst [vmem:[%s1074 + $0x1c] sm:$0xff] %v1066
        %1080 = vst [vmem:[%s1074 + $0x24] sm:$0xf] %v1067
        %v1081 = vld [vmem:[#allocation2] sm:$0xf]
        %v1082 = vld [vmem:[#allocation2 + $0x14] sm:$0xf]
        %v1083 = vld [vmem:[#allocation2 + $0x28] sm:$0xf]
        %v1084 = vld [vmem:[#allocation2 + $0x3c] sm:$0xf]
        %v1085 = vld [vmem:[#allocation2 + $0x50] sm:$0xf]
        %v1086 = vld [vmem:[#allocation2 + $0x64] sm:$0xf]
        %v1087 = vld [vmem:[#allocation2 + $0x78] sm:$0xf]
        %v1088 = vld [vmem:[#allocation2 + $0x8c] sm:$0xf]
        %v1097 = vunpack.c.l.b16 %v1081
        %v1098 = vunpack.c.l.b16 %v1082
        %v1099 = vunpack.c.l.b16 %v1083
        %v1100 = vunpack.c.l.b16 %v1084
        %v1101 = vunpack.c.l.b16 %v1085
        %v1102 = vunpack.c.l.b16 %v1086
        %v1103 = vunpack.c.l.b16 %v1087
        %v1104 = vunpack.c.l.b16 %v1088
        %v1105 = vpack.c.b16 %v1098, %v1097
        %v1106 = vpack.c.b16 %v1100, %v1099
        %v1107 = vpack.c.b16 %v1102, %v1101
        %v1108 = vpack.c.b16 %v1104, %v1103
        %v1129 = vunpack.c.l.b16 %v327
        %v1130 = vunpack.c.l.b16 %v328
        %v1131 = vunpack.c.l.b16 %v329
        %v1132 = vunpack.c.l.b16 %v330
        %v1133 = vunpack.c.l.b16 %v331
        %v1134 = vunpack.c.l.b16 %v332
        %v1135 = vunpack.c.l.b16 %v333
        %v1136 = vunpack.c.l.b16 %v334
        %v1137 = vunpack.c.l.b16 %v335
        %v1138 = vunpack.c.l.b16 %v336
        %v1139 = vunpack.c.l.b16 %v337
        %v1140 = vunpack.c.l.b16 %v338
        %v1141 = vunpack.c.l.b16 %v339
        %v1142 = vunpack.c.l.b16 %v340
        %v1143 = vunpack.c.l.b16 %v341
        %v1144 = vunpack.c.l.b16 %v342
        %v1145 = vpack.c.b16 %v1130, %v1129
        %v1146 = vpack.c.b16 %v1132, %v1131
        %v1147 = vpack.c.b16 %v1134, %v1133
        %v1148 = vpack.c.b16 %v1136, %v1135
        %v1149 = vpack.c.b16 %v1138, %v1137
        %v1150 = vpack.c.b16 %v1140, %v1139
        %v1151 = vpack.c.b16 %v1142, %v1141
        %v1152 = vpack.c.b16 %v1144, %v1143
        %1161 = vmatprep.subr.bf16.mxu0 0
        %1162 = vmatpush1.bf16.msra.mxu0 %v1152
        %1163 = vmatprep.subr.bf16.mxu0 0
        %1164 = vmatpush1.bf16.msra.mxu0 %v1151
        %1165 = vmatprep.subr.bf16.mxu0 0
        %1166 = vmatpush1.bf16.msra.mxu0 %v1150
        %1167 = vmatprep.subr.bf16.mxu0 0
        %1168 = vmatpush1.bf16.msra.mxu0 %v1149
        %1169 = vmatprep.subr.bf16.mxu0 0
        %1170 = vmatpush1.bf16.msra.mxu0 %v1148
        %1171 = vmatprep.subr.bf16.mxu0 0
        %1172 = vmatpush1.bf16.msra.mxu0 %v1147
        %1173 = vmatprep.subr.bf16.mxu0 0
        %1174 = vmatpush1.bf16.msra.mxu0 %v1146
        %1175 = vmatprep.subr.bf16.mxu0 0
        %1176 = vmatpush1.bf16.msra.mxu0 %v1145
        %1177 = vmatprep.subr.bf16.mxu0 0
        %1178 = vmatpush2.bf16.msra.mxu0 0
        %1179 = vmatprep.subr.bf16.mxu0 0
        %1180 = vmatpush2.bf16.msra.mxu0 0
        %1181 = vmatprep.subr.bf16.mxu0 0
        %1182 = vmatpush2.bf16.msra.mxu0 0
        %1183 = vmatprep.subr.bf16.mxu0 0
        %1184 = vmatpush2.bf16.msra.mxu0 0
        %1185 = vmatprep.subr.bf16.mxu0 0
        %1186 = vmatpush2.bf16.msra.mxu0 0
        %1187 = vmatprep.subr.bf16.mxu0 0
        %1188 = vmatpush2.bf16.msra.mxu0 0
        %1189 = vmatprep.subr.bf16.mxu0 0
        %1190 = vmatpush2.bf16.msra.mxu0 0
        %1191 = vmatprep.subr.bf16.mxu0 0
        %1192 = vmatpush2.bf16.msra.mxu0 0
        %1193 = vmatprep.mubr.bf16.mxu0 0
        %1194 = vmatmul.mubr.bf16.gmra.mxu0 %v1105
        %v1195 = vpop.f32.mrf.mxu0
        %v1196 = vadd.f32 0.0, %v1195
        %v1197 = vpop.f32.mrf.mxu0
        %v1198 = vpop.f32.mrf.mxu0
        %v1199 = vadd.f32 0.0, %v1198
        %v1200 = vpop.f32.mrf.mxu0
        %1201 = vmatprep.mubr.bf16.mxu0 0
        %1202 = vmatmul.mubr.bf16.gmra.mxu0 %v1106
        %v1203 = vpop.f32.mrf.mxu0
        %v1204 = vadd.f32 0.0, %v1203
        %v1205 = vpop.f32.mrf.mxu0
        %v1206 = vpop.f32.mrf.mxu0
        %v1207 = vadd.f32 0.0, %v1206
        %v1208 = vpop.f32.mrf.mxu0
        %1209 = vmatprep.mubr.bf16.mxu0 0
        %1210 = vmatmul.mubr.bf16.gmra.mxu0 %v1107
        %v1211 = vpop.f32.mrf.mxu0
        %v1212 = vadd.f32 0.0, %v1211
        %v1213 = vpop.f32.mrf.mxu0
        %v1214 = vpop.f32.mrf.mxu0
        %v1215 = vadd.f32 0.0, %v1214
        %v1216 = vpop.f32.mrf.mxu0
        %1217 = vmatprep.mubr.bf16.mxu0 0
        %1218 = vmatmul.mubr.bf16.gmra.mxu0 %v1108
        %v1219 = vpop.f32.mrf.mxu0
        %v1220 = vadd.f32 0.0, %v1219
        %v1221 = vpop.f32.mrf.mxu0
        %v1222 = vpop.f32.mrf.mxu0
        %v1223 = vadd.f32 0.0, %v1222
        %v1224 = vpop.f32.mrf.mxu0
        %1225 = vdwg.mxu0
        %v1226 = vld [vmem:[#allocation2 + $0x4] sm:$0xf]
        %v1227 = vld [vmem:[#allocation2 + $0x18] sm:$0xf]
        %v1228 = vld [vmem:[#allocation2 + $0x2c] sm:$0xf]
        %v1229 = vld [vmem:[#allocation2 + $0x40] sm:$0xf]
        %v1230 = vld [vmem:[#allocation2 + $0x54] sm:$0xf]
        %v1231 = vld [vmem:[#allocation2 + $0x68] sm:$0xf]
        %v1232 = vld [vmem:[#allocation2 + $0x7c] sm:$0xf]
        %v1233 = vld [vmem:[#allocation2 + $0x90] sm:$0xf]
        %v1242 = vunpack.c.l.b16 %v1226
        %v1243 = vunpack.c.l.b16 %v1227
        %v1244 = vunpack.c.l.b16 %v1228
        %v1245 = vunpack.c.l.b16 %v1229
        %v1246 = vunpack.c.l.b16 %v1230
        %v1247 = vunpack.c.l.b16 %v1231
        %v1248 = vunpack.c.l.b16 %v1232
        %v1249 = vunpack.c.l.b16 %v1233
        %v1250 = vpack.c.b16 %v1243, %v1242
        %v1251 = vpack.c.b16 %v1245, %v1244
        %v1252 = vpack.c.b16 %v1247, %v1246
        %v1253 = vpack.c.b16 %v1249, %v1248
        %1258 = vmatprep.subr.bf16.mxu0 0
        %1259 = vmatpush1.bf16.msra.mxu0 %v1152
        %1260 = vmatprep.subr.bf16.mxu0 0
        %1261 = vmatpush1.bf16.msra.mxu0 %v1151
        %1262 = vmatprep.subr.bf16.mxu0 0
        %1263 = vmatpush1.bf16.msra.mxu0 %v1150
        %1264 = vmatprep.subr.bf16.mxu0 0
        %1265 = vmatpush1.bf16.msra.mxu0 %v1149
        %1266 = vmatprep.subr.bf16.mxu0 0
        %1267 = vmatpush1.bf16.msra.mxu0 %v1148
        %1268 = vmatprep.subr.bf16.mxu0 0
        %1269 = vmatpush1.bf16.msra.mxu0 %v1147
        %1270 = vmatprep.subr.bf16.mxu0 0
        %1271 = vmatpush1.bf16.msra.mxu0 %v1146
        %1272 = vmatprep.subr.bf16.mxu0 0
        %1273 = vmatpush1.bf16.msra.mxu0 %v1145
        %1274 = vmatprep.subr.bf16.mxu0 0
        %1275 = vmatpush2.bf16.msra.mxu0 0
        %1276 = vmatprep.subr.bf16.mxu0 0
        %1277 = vmatpush2.bf16.msra.mxu0 0
        %1278 = vmatprep.subr.bf16.mxu0 0
        %1279 = vmatpush2.bf16.msra.mxu0 0
        %1280 = vmatprep.subr.bf16.mxu0 0
        %1281 = vmatpush2.bf16.msra.mxu0 0
        %1282 = vmatprep.subr.bf16.mxu0 0
        %1283 = vmatpush2.bf16.msra.mxu0 0
        %1284 = vmatprep.subr.bf16.mxu0 0
        %1285 = vmatpush2.bf16.msra.mxu0 0
        %1286 = vmatprep.subr.bf16.mxu0 0
        %1287 = vmatpush2.bf16.msra.mxu0 0
        %1288 = vmatprep.subr.bf16.mxu0 0
        %1289 = vmatpush2.bf16.msra.mxu0 0
        %1290 = vmatprep.mubr.bf16.mxu0 0
        %1291 = vmatmul.mubr.bf16.gmra.mxu0 %v1250
        %v1292 = vpop.f32.mrf.mxu0
        %v1293 = vadd.f32 0.0, %v1292
        %v1294 = vpop.f32.mrf.mxu0
        %v1295 = vpop.f32.mrf.mxu0
        %v1296 = vadd.f32 0.0, %v1295
        %v1297 = vpop.f32.mrf.mxu0
        %1298 = vmatprep.mubr.bf16.mxu0 0
        %1299 = vmatmul.mubr.bf16.gmra.mxu0 %v1251
        %v1300 = vpop.f32.mrf.mxu0
        %v1301 = vadd.f32 0.0, %v1300
        %v1302 = vpop.f32.mrf.mxu0
        %v1303 = vpop.f32.mrf.mxu0
        %v1304 = vadd.f32 0.0, %v1303
        %v1305 = vpop.f32.mrf.mxu0
        %1306 = vmatprep.mubr.bf16.mxu0 0
        %1307 = vmatmul.mubr.bf16.gmra.mxu0 %v1252
        %v1308 = vpop.f32.mrf.mxu0
        %v1309 = vadd.f32 0.0, %v1308
        %v1310 = vpop.f32.mrf.mxu0
        %v1311 = vpop.f32.mrf.mxu0
        %v1312 = vadd.f32 0.0, %v1311
        %v1313 = vpop.f32.mrf.mxu0
        %1314 = vmatprep.mubr.bf16.mxu0 0
        %1315 = vmatmul.mubr.bf16.gmra.mxu0 %v1253
        %v1316 = vpop.f32.mrf.mxu0
        %v1317 = vadd.f32 0.0, %v1316
        %v1318 = vpop.f32.mrf.mxu0
        %v1319 = vpop.f32.mrf.mxu0
        %v1320 = vadd.f32 0.0, %v1319
        %v1321 = vpop.f32.mrf.mxu0
        %1322 = vdwg.mxu0
        %v1323 = vld [vmem:[#allocation2 + $0x8] sm:$0xf]
        %v1324 = vld [vmem:[#allocation2 + $0x1c] sm:$0xf]
        %v1325 = vld [vmem:[#allocation2 + $0x30] sm:$0xf]
        %v1326 = vld [vmem:[#allocation2 + $0x44] sm:$0xf]
        %v1327 = vld [vmem:[#allocation2 + $0x58] sm:$0xf]
        %v1328 = vld [vmem:[#allocation2 + $0x6c] sm:$0xf]
        %v1329 = vld [vmem:[#allocation2 + $0x80] sm:$0xf]
        %v1330 = vld [vmem:[#allocation2 + $0x94] sm:$0xf]
        %v1339 = vunpack.c.l.b16 %v1323
        %v1340 = vunpack.c.l.b16 %v1324
        %v1341 = vunpack.c.l.b16 %v1325
        %v1342 = vunpack.c.l.b16 %v1326
        %v1343 = vunpack.c.l.b16 %v1327
        %v1344 = vunpack.c.l.b16 %v1328
        %v1345 = vunpack.c.l.b16 %v1329
        %v1346 = vunpack.c.l.b16 %v1330
        %v1347 = vpack.c.b16 %v1340, %v1339
        %v1348 = vpack.c.b16 %v1342, %v1341
        %v1349 = vpack.c.b16 %v1344, %v1343
        %v1350 = vpack.c.b16 %v1346, %v1345
        %1355 = vmatprep.subr.bf16.mxu0 0
        %1356 = vmatpush1.bf16.msra.mxu0 %v1152
        %1357 = vmatprep.subr.bf16.mxu0 0
        %1358 = vmatpush1.bf16.msra.mxu0 %v1151
        %1359 = vmatprep.subr.bf16.mxu0 0
        %1360 = vmatpush1.bf16.msra.mxu0 %v1150
        %1361 = vmatprep.subr.bf16.mxu0 0
        %1362 = vmatpush1.bf16.msra.mxu0 %v1149
        %1363 = vmatprep.subr.bf16.mxu0 0
        %1364 = vmatpush1.bf16.msra.mxu0 %v1148
        %1365 = vmatprep.subr.bf16.mxu0 0
        %1366 = vmatpush1.bf16.msra.mxu0 %v1147
        %1367 = vmatprep.subr.bf16.mxu0 0
        %1368 = vmatpush1.bf16.msra.mxu0 %v1146
        %1369 = vmatprep.subr.bf16.mxu0 0
        %1370 = vmatpush1.bf16.msra.mxu0 %v1145
        %1371 = vmatprep.subr.bf16.mxu0 0
        %1372 = vmatpush2.bf16.msra.mxu0 0
        %1373 = vmatprep.subr.bf16.mxu0 0
        %1374 = vmatpush2.bf16.msra.mxu0 0
        %1375 = vmatprep.subr.bf16.mxu0 0
        %1376 = vmatpush2.bf16.msra.mxu0 0
        %1377 = vmatprep.subr.bf16.mxu0 0
        %1378 = vmatpush2.bf16.msra.mxu0 0
        %1379 = vmatprep.subr.bf16.mxu0 0
        %1380 = vmatpush2.bf16.msra.mxu0 0
        %1381 = vmatprep.subr.bf16.mxu0 0
        %1382 = vmatpush2.bf16.msra.mxu0 0
        %1383 = vmatprep.subr.bf16.mxu0 0
        %1384 = vmatpush2.bf16.msra.mxu0 0
        %1385 = vmatprep.subr.bf16.mxu0 0
        %1386 = vmatpush2.bf16.msra.mxu0 0
        %1387 = vmatprep.mubr.bf16.mxu0 0
        %1388 = vmatmul.mubr.bf16.gmra.mxu0 %v1347
        %v1389 = vpop.f32.mrf.mxu0
        %v1390 = vadd.f32 0.0, %v1389
        %v1391 = vpop.f32.mrf.mxu0
        %v1392 = vpop.f32.mrf.mxu0
        %v1393 = vadd.f32 0.0, %v1392
        %v1394 = vpop.f32.mrf.mxu0
        %1395 = vmatprep.mubr.bf16.mxu0 0
        %1396 = vmatmul.mubr.bf16.gmra.mxu0 %v1348
        %v1397 = vpop.f32.mrf.mxu0
        %v1398 = vadd.f32 0.0, %v1397
        %v1399 = vpop.f32.mrf.mxu0
        %v1400 = vpop.f32.mrf.mxu0
        %v1401 = vadd.f32 0.0, %v1400
        %v1402 = vpop.f32.mrf.mxu0
        %1403 = vmatprep.mubr.bf16.mxu0 0
        %1404 = vmatmul.mubr.bf16.gmra.mxu0 %v1349
        %v1405 = vpop.f32.mrf.mxu0
        %v1406 = vadd.f32 0.0, %v1405
        %v1407 = vpop.f32.mrf.mxu0
        %v1408 = vpop.f32.mrf.mxu0
        %v1409 = vadd.f32 0.0, %v1408
        %v1410 = vpop.f32.mrf.mxu0
        %1411 = vmatprep.mubr.bf16.mxu0 0
        %1412 = vmatmul.mubr.bf16.gmra.mxu0 %v1350
        %v1413 = vpop.f32.mrf.mxu0
        %v1414 = vadd.f32 0.0, %v1413
        %v1415 = vpop.f32.mrf.mxu0
        %v1416 = vpop.f32.mrf.mxu0
        %v1417 = vadd.f32 0.0, %v1416
        %v1418 = vpop.f32.mrf.mxu0
        %1419 = vdwg.mxu0
        %v1420 = vld [vmem:[#allocation2 + $0xc] sm:$0xf]
        %v1421 = vld [vmem:[#allocation2 + $0x20] sm:$0xf]
        %v1422 = vld [vmem:[#allocation2 + $0x34] sm:$0xf]
        %v1423 = vld [vmem:[#allocation2 + $0x48] sm:$0xf]
        %v1424 = vld [vmem:[#allocation2 + $0x5c] sm:$0xf]
        %v1425 = vld [vmem:[#allocation2 + $0x70] sm:$0xf]
        %v1426 = vld [vmem:[#allocation2 + $0x84] sm:$0xf]
        %v1427 = vld [vmem:[#allocation2 + $0x98] sm:$0xf]
        %v1436 = vunpack.c.l.b16 %v1420
        %v1437 = vunpack.c.l.b16 %v1421
        %v1438 = vunpack.c.l.b16 %v1422
        %v1439 = vunpack.c.l.b16 %v1423
        %v1440 = vunpack.c.l.b16 %v1424
        %v1441 = vunpack.c.l.b16 %v1425
        %v1442 = vunpack.c.l.b16 %v1426
        %v1443 = vunpack.c.l.b16 %v1427
        %v1444 = vpack.c.b16 %v1437, %v1436
        %v1445 = vpack.c.b16 %v1439, %v1438
        %v1446 = vpack.c.b16 %v1441, %v1440
        %v1447 = vpack.c.b16 %v1443, %v1442
        %1452 = vmatprep.subr.bf16.mxu0 0
        %1453 = vmatpush1.bf16.msra.mxu0 %v1152
        %1454 = vmatprep.subr.bf16.mxu0 0
        %1455 = vmatpush1.bf16.msra.mxu0 %v1151
        %1456 = vmatprep.subr.bf16.mxu0 0
        %1457 = vmatpush1.bf16.msra.mxu0 %v1150
        %1458 = vmatprep.subr.bf16.mxu0 0
        %1459 = vmatpush1.bf16.msra.mxu0 %v1149
        %1460 = vmatprep.subr.bf16.mxu0 0
        %1461 = vmatpush1.bf16.msra.mxu0 %v1148
        %1462 = vmatprep.subr.bf16.mxu0 0
        %1463 = vmatpush1.bf16.msra.mxu0 %v1147
        %1464 = vmatprep.subr.bf16.mxu0 0
        %1465 = vmatpush1.bf16.msra.mxu0 %v1146
        %1466 = vmatprep.subr.bf16.mxu0 0
        %1467 = vmatpush1.bf16.msra.mxu0 %v1145
        %1468 = vmatprep.subr.bf16.mxu0 0
        %1469 = vmatpush2.bf16.msra.mxu0 0
        %1470 = vmatprep.subr.bf16.mxu0 0
        %1471 = vmatpush2.bf16.msra.mxu0 0
        %1472 = vmatprep.subr.bf16.mxu0 0
        %1473 = vmatpush2.bf16.msra.mxu0 0
        %1474 = vmatprep.subr.bf16.mxu0 0
        %1475 = vmatpush2.bf16.msra.mxu0 0
        %1476 = vmatprep.subr.bf16.mxu0 0
        %1477 = vmatpush2.bf16.msra.mxu0 0
        %1478 = vmatprep.subr.bf16.mxu0 0
        %1479 = vmatpush2.bf16.msra.mxu0 0
        %1480 = vmatprep.subr.bf16.mxu0 0
        %1481 = vmatpush2.bf16.msra.mxu0 0
        %1482 = vmatprep.subr.bf16.mxu0 0
        %1483 = vmatpush2.bf16.msra.mxu0 0
        %1484 = vmatprep.mubr.bf16.mxu0 0
        %1485 = vmatmul.mubr.bf16.gmra.mxu0 %v1444
        %v1486 = vpop.f32.mrf.mxu0
        %v1487 = vadd.f32 0.0, %v1486
        %v1488 = vpop.f32.mrf.mxu0
        %v1489 = vpop.f32.mrf.mxu0
        %v1490 = vadd.f32 0.0, %v1489
        %v1491 = vpop.f32.mrf.mxu0
        %1492 = vmatprep.mubr.bf16.mxu0 0
        %1493 = vmatmul.mubr.bf16.gmra.mxu0 %v1445
        %v1494 = vpop.f32.mrf.mxu0
        %v1495 = vadd.f32 0.0, %v1494
        %v1496 = vpop.f32.mrf.mxu0
        %v1497 = vpop.f32.mrf.mxu0
        %v1498 = vadd.f32 0.0, %v1497
        %v1499 = vpop.f32.mrf.mxu0
        %1500 = vmatprep.mubr.bf16.mxu0 0
        %1501 = vmatmul.mubr.bf16.gmra.mxu0 %v1446
        %v1502 = vpop.f32.mrf.mxu0
        %v1503 = vadd.f32 0.0, %v1502
        %v1504 = vpop.f32.mrf.mxu0
        %v1505 = vpop.f32.mrf.mxu0
        %v1506 = vadd.f32 0.0, %v1505
        %v1507 = vpop.f32.mrf.mxu0
        %1508 = vmatprep.mubr.bf16.mxu0 0
        %1509 = vmatmul.mubr.bf16.gmra.mxu0 %v1447
        %v1510 = vpop.f32.mrf.mxu0
        %v1511 = vadd.f32 0.0, %v1510
        %v1512 = vpop.f32.mrf.mxu0
        %v1513 = vpop.f32.mrf.mxu0
        %v1514 = vadd.f32 0.0, %v1513
        %v1515 = vpop.f32.mrf.mxu0
        %1516 = vdwg.mxu0
        %v1517 = vld [vmem:[#allocation2 + $0x10] sm:$0xf]
        %v1518 = vld [vmem:[#allocation2 + $0x24] sm:$0xf]
        %v1519 = vld [vmem:[#allocation2 + $0x38] sm:$0xf]
        %v1520 = vld [vmem:[#allocation2 + $0x4c] sm:$0xf]
        %v1521 = vld [vmem:[#allocation2 + $0x60] sm:$0xf]
        %v1522 = vld [vmem:[#allocation2 + $0x74] sm:$0xf]
        %v1523 = vld [vmem:[#allocation2 + $0x88] sm:$0xf]
        %v1524 = vld [vmem:[#allocation2 + $0x9c] sm:$0xf]
        %v1533 = vunpack.c.l.b16 %v1517
        %v1534 = vunpack.c.l.b16 %v1518
        %v1535 = vunpack.c.l.b16 %v1519
        %v1536 = vunpack.c.l.b16 %v1520
        %v1537 = vunpack.c.l.b16 %v1521
        %v1538 = vunpack.c.l.b16 %v1522
        %v1539 = vunpack.c.l.b16 %v1523
        %v1540 = vunpack.c.l.b16 %v1524
        %v1541 = vpack.c.b16 %v1534, %v1533
        %v1542 = vpack.c.b16 %v1536, %v1535
        %v1543 = vpack.c.b16 %v1538, %v1537
        %v1544 = vpack.c.b16 %v1540, %v1539
        %1549 = vmatprep.subr.bf16.mxu0 0
        %1550 = vmatpush1.bf16.msra.mxu0 %v1152
        %1551 = vmatprep.subr.bf16.mxu0 0
        %1552 = vmatpush1.bf16.msra.mxu0 %v1151
        %1553 = vmatprep.subr.bf16.mxu0 0
        %1554 = vmatpush1.bf16.msra.mxu0 %v1150
        %1555 = vmatprep.subr.bf16.mxu0 0
        %1556 = vmatpush1.bf16.msra.mxu0 %v1149
        %1557 = vmatprep.subr.bf16.mxu0 0
        %1558 = vmatpush1.bf16.msra.mxu0 %v1148
        %1559 = vmatprep.subr.bf16.mxu0 0
        %1560 = vmatpush1.bf16.msra.mxu0 %v1147
        %1561 = vmatprep.subr.bf16.mxu0 0
        %1562 = vmatpush1.bf16.msra.mxu0 %v1146
        %1563 = vmatprep.subr.bf16.mxu0 0
        %1564 = vmatpush1.bf16.msra.mxu0 %v1145
        %1565 = vmatprep.subr.bf16.mxu0 0
        %1566 = vmatpush2.bf16.msra.mxu0 0
        %1567 = vmatprep.subr.bf16.mxu0 0
        %1568 = vmatpush2.bf16.msra.mxu0 0
        %1569 = vmatprep.subr.bf16.mxu0 0
        %1570 = vmatpush2.bf16.msra.mxu0 0
        %1571 = vmatprep.subr.bf16.mxu0 0
        %1572 = vmatpush2.bf16.msra.mxu0 0
        %1573 = vmatprep.subr.bf16.mxu0 0
        %1574 = vmatpush2.bf16.msra.mxu0 0
        %1575 = vmatprep.subr.bf16.mxu0 0
        %1576 = vmatpush2.bf16.msra.mxu0 0
        %1577 = vmatprep.subr.bf16.mxu0 0
        %1578 = vmatpush2.bf16.msra.mxu0 0
        %1579 = vmatprep.subr.bf16.mxu0 0
        %1580 = vmatpush2.bf16.msra.mxu0 0
        %1581 = vmatprep.mubr.bf16.mxu0 0
        %1582 = vmatmul.mubr.bf16.gmra.mxu0 %v1541
        %v1583 = vpop.f32.mrf.mxu0
        %v1584 = vadd.f32 0.0, %v1583
        %v1585 = vpop.f32.mrf.mxu0
        %v1586 = vpop.f32.mrf.mxu0
        %v1587 = vadd.f32 0.0, %v1586
        %v1588 = vpop.f32.mrf.mxu0
        %1589 = vmatprep.mubr.bf16.mxu0 0
        %1590 = vmatmul.mubr.bf16.gmra.mxu0 %v1542
        %v1591 = vpop.f32.mrf.mxu0
        %v1592 = vadd.f32 0.0, %v1591
        %v1593 = vpop.f32.mrf.mxu0
        %v1594 = vpop.f32.mrf.mxu0
        %v1595 = vadd.f32 0.0, %v1594
        %v1596 = vpop.f32.mrf.mxu0
        %1597 = vmatprep.mubr.bf16.mxu0 0
        %1598 = vmatmul.mubr.bf16.gmra.mxu0 %v1543
        %v1599 = vpop.f32.mrf.mxu0
        %v1600 = vadd.f32 0.0, %v1599
        %v1601 = vpop.f32.mrf.mxu0
        %v1602 = vpop.f32.mrf.mxu0
        %v1603 = vadd.f32 0.0, %v1602
        %v1604 = vpop.f32.mrf.mxu0
        %1605 = vmatprep.mubr.bf16.mxu0 0
        %1606 = vmatmul.mubr.bf16.gmra.mxu0 %v1544
        %v1607 = vpop.f32.mrf.mxu0
        %v1608 = vadd.f32 0.0, %v1607
        %v1609 = vpop.f32.mrf.mxu0
        %v1610 = vpop.f32.mrf.mxu0
        %v1611 = vadd.f32 0.0, %v1610
        %v1612 = vpop.f32.mrf.mxu0
        %1613 = vdwg.mxu0
        %v1614 = vmul.f32 %v1196, %v1196
        %v1615 = vmul.f32 %v1199, %v1199
        %v1616 = vmul.f32 %v1204, %v1204
        %v1617 = vmul.f32 %v1207, %v1207
        %v1618 = vmul.f32 %v1212, %v1212
        %v1619 = vmul.f32 %v1215, %v1215
        %v1620 = vmul.f32 %v1220, %v1220
        %v1621 = vmul.f32 %v1223, %v1223
        %v1622 = vmul.f32 %v1293, %v1293
        %v1623 = vmul.f32 %v1296, %v1296
        %v1624 = vmul.f32 %v1301, %v1301
        %v1625 = vmul.f32 %v1304, %v1304
        %v1626 = vmul.f32 %v1309, %v1309
        %v1627 = vmul.f32 %v1312, %v1312
        %v1628 = vmul.f32 %v1317, %v1317
        %v1629 = vmul.f32 %v1320, %v1320
        %v1630 = vmul.f32 %v1196, %v1293
        %v1631 = vmul.f32 %v1199, %v1296
        %v1632 = vmul.f32 %v1204, %v1301
        %v1633 = vmul.f32 %v1207, %v1304
        %v1634 = vmul.f32 %v1212, %v1309
        %v1635 = vmul.f32 %v1215, %v1312
        %v1636 = vmul.f32 %v1220, %v1317
        %v1637 = vmul.f32 %v1223, %v1320
        %v1638 = vsub.f32 %v1390, %v1614
        %v1639 = vsub.f32 %v1393, %v1615
        %v1640 = vsub.f32 %v1398, %v1616
        %v1641 = vsub.f32 %v1401, %v1617
        %v1642 = vsub.f32 %v1406, %v1618
        %v1643 = vsub.f32 %v1409, %v1619
        %v1644 = vsub.f32 %v1414, %v1620
        %v1645 = vsub.f32 %v1417, %v1621
        %v1646 = vsub.f32 %v1487, %v1622
        %v1647 = vsub.f32 %v1490, %v1623
        %v1648 = vsub.f32 %v1495, %v1624
        %v1649 = vsub.f32 %v1498, %v1625
        %v1650 = vsub.f32 %v1503, %v1626
        %v1651 = vsub.f32 %v1506, %v1627
        %v1652 = vsub.f32 %v1511, %v1628
        %v1653 = vsub.f32 %v1514, %v1629
        %v1654 = vsub.f32 %v1584, %v1630
        %v1655 = vsub.f32 %v1587, %v1631
        %v1656 = vsub.f32 %v1592, %v1632
        %v1657 = vsub.f32 %v1595, %v1633
        %v1658 = vsub.f32 %v1600, %v1634
        %v1659 = vsub.f32 %v1603, %v1635
        %v1660 = vsub.f32 %v1608, %v1636
        %v1661 = vsub.f32 %v1611, %v1637
        %v1662 = vmul.f32 %v1654, 2.0
        %v1663 = vmul.f32 %v1655, 2.0
        %v1664 = vmul.f32 %v1656, 2.0
        %v1665 = vmul.f32 %v1657, 2.0
        %v1666 = vmul.f32 %v1658, 2.0
        %v1667 = vmul.f32 %v1659, 2.0
        %v1668 = vmul.f32 %v1660, 2.0
        %v1669 = vmul.f32 %v1661, 2.0
        %v1670 = vstv %s324
        %v1671 = vadd.f32 %v1662, %v1670
        %v1672 = vadd.f32 %v1663, %v1670
        %v1673 = vadd.f32 %v1664, %v1670
        %v1674 = vadd.f32 %v1665, %v1670
        %v1675 = vadd.f32 %v1666, %v1670
        %v1676 = vadd.f32 %v1667, %v1670
        %v1677 = vadd.f32 %v1668, %v1670
        %v1678 = vadd.f32 %v1669, %v1670
        %v1679 = vadd.f32 %v1638, %v1646
        %v1680 = vadd.f32 %v1639, %v1647
        %v1681 = vadd.f32 %v1640, %v1648
        %v1682 = vadd.f32 %v1641, %v1649
        %v1683 = vadd.f32 %v1642, %v1650
        %v1684 = vadd.f32 %v1643, %v1651
        %v1685 = vadd.f32 %v1644, %v1652
        %v1686 = vadd.f32 %v1645, %v1653
        %v1687 = vadd.f32 %v1679, %v1670
        %v1688 = vadd.f32 %v1680, %v1670
        %v1689 = vadd.f32 %v1681, %v1670
        %v1690 = vadd.f32 %v1682, %v1670
        %v1691 = vadd.f32 %v1683, %v1670
        %v1692 = vadd.f32 %v1684, %v1670
        %v1693 = vadd.f32 %v1685, %v1670
        %v1694 = vadd.f32 %v1686, %v1670
        %v1695 = vmul.f32 %v1630, 2.0
        %v1696 = vmul.f32 %v1631, 2.0
        %v1697 = vmul.f32 %v1632, 2.0
        %v1698 = vmul.f32 %v1633, 2.0
        %v1699 = vmul.f32 %v1634, 2.0
        %v1700 = vmul.f32 %v1635, 2.0
        %v1701 = vmul.f32 %v1636, 2.0
        %v1702 = vmul.f32 %v1637, 2.0
        %v1703 = vstv %s323
        %v1704 = vadd.f32 %v1695, %v1703
        %v1705 = vadd.f32 %v1696, %v1703
        %v1706 = vadd.f32 %v1697, %v1703
        %v1707 = vadd.f32 %v1698, %v1703
        %v1708 = vadd.f32 %v1699, %v1703
        %v1709 = vadd.f32 %v1700, %v1703
        %v1710 = vadd.f32 %v1701, %v1703
        %v1711 = vadd.f32 %v1702, %v1703
        %v1712 = vmul.f32 %v1704, %v1671
        %v1713 = vmul.f32 %v1705, %v1672
        %v1714 = vmul.f32 %v1706, %v1673
        %v1715 = vmul.f32 %v1707, %v1674
        %v1716 = vmul.f32 %v1708, %v1675
        %v1717 = vmul.f32 %v1709, %v1676
        %v1718 = vmul.f32 %v1710, %v1677
        %v1719 = vmul.f32 %v1711, %v1678
        %v1720 = vadd.f32 %v1614, %v1622
        %v1721 = vadd.f32 %v1615, %v1623
        %v1722 = vadd.f32 %v1616, %v1624
        %v1723 = vadd.f32 %v1617, %v1625
        %v1724 = vadd.f32 %v1618, %v1626
        %v1725 = vadd.f32 %v1619, %v1627
        %v1726 = vadd.f32 %v1620, %v1628
        %v1727 = vadd.f32 %v1621, %v1629
        %v1728 = vadd.f32 %v1720, %v1703
        %v1729 = vadd.f32 %v1721, %v1703
        %v1730 = vadd.f32 %v1722, %v1703
        %v1731 = vadd.f32 %v1723, %v1703
        %v1732 = vadd.f32 %v1724, %v1703
        %v1733 = vadd.f32 %v1725, %v1703
        %v1734 = vadd.f32 %v1726, %v1703
        %v1735 = vadd.f32 %v1727, %v1703
        %v1736 = vmul.f32 %v1728, %v1687
        %v1737 = vmul.f32 %v1729, %v1688
        %v1738 = vmul.f32 %v1730, %v1689
        %v1739 = vmul.f32 %v1731, %v1690
        %v1740 = vmul.f32 %v1732, %v1691
        %v1741 = vmul.f32 %v1733, %v1692
        %v1742 = vmul.f32 %v1734, %v1693
        %v1743 = vmul.f32 %v1735, %v1694
        %v1744 = vrcp.pop %v1736
        %v1745 = vrcp.pop %v1737
        %v1746 = vrcp.pop %v1738
        %v1747 = vrcp.pop %v1739
        %v1748 = vrcp.pop %v1740
        %v1749 = vrcp.pop %v1741
        %v1750 = vrcp.pop %v1742
        %v1751 = vrcp.pop %v1743
        %v1752 = vmul.f32 %v1712, %v1744
        %v1753 = vmul.f32 %v1713, %v1745
        %v1754 = vmul.f32 %v1714, %v1746
        %v1755 = vmul.f32 %v1715, %v1747
        %v1756 = vmul.f32 %v1716, %v1748
        %v1757 = vmul.f32 %v1717, %v1749
        %v1758 = vmul.f32 %v1718, %v1750
        %v1759 = vmul.f32 %v1719, %v1751
        %v1760 = vlaneseq
        %v1761 = vshrl.u32 %v1760, 7
        %v1762 = vadd.s32 %v1761, 8
        %v1763 = vlaneseq
        %v1764 = vand.u32 %v1763, 127
        %vm1765 = vcmp.lt.s32.totalorder %v1761, 16
        %vm1766 = vcmp.lt.s32.totalorder %v1762, 16
        %vm1767 = vcmp.lt.s32.totalorder %v1764, 16
        %vm1768 = vmand %vm1765, %vm1767
        %vm1769 = vmand %vm1766, %vm1767
        %v1770 = vsel %vm1768, 1, 0
        %v1771 = vsel %vm1769, 1, 0
        %vm1772 = vcmp.eq.s32.totalorder %v1770, 1
        %vm1773 = vcmp.eq.s32.totalorder %v1771, 1
        %v1774 = vsel %vm1772, %v1752, 0.0
        %v1775 = vsel %vm1773, %v1753, 0.0
        %v1776 = vsel %vm1772, %v1754, 0.0
        %v1777 = vsel %vm1773, %v1755, 0.0
        %v1778 = vsel %vm1772, %v1756, 0.0
        %v1779 = vsel %vm1773, %v1757, 0.0
        %v1780 = vsel %vm1772, %v1758, 0.0
        %v1781 = vsel %vm1773, %v1759, 0.0
        %1782 = vadd.xlane.f32.xlu0 %v1774
        %v1783 = vpop.xlane.xlu0 %1782
        %1784 = vadd.xlane.f32.xlu0 %v1775
        %v1785 = vpop.xlane.xlu0 %1784
        %1786 = vadd.xlane.f32.xlu0 %v1776
        %v1787 = vpop.xlane.xlu0 %1786
        %1788 = vadd.xlane.f32.xlu0 %v1777
        %v1789 = vpop.xlane.xlu0 %1788
        %1790 = vadd.xlane.f32.xlu0 %v1778
        %v1791 = vpop.xlane.xlu0 %1790
        %1792 = vadd.xlane.f32.xlu0 %v1779
        %v1793 = vpop.xlane.xlu0 %1792
        %1794 = vadd.xlane.f32.xlu0 %v1780
        %v1795 = vpop.xlane.xlu0 %1794
        %1796 = vadd.xlane.f32.xlu0 %v1781
        %v1797 = vpop.xlane.xlu0 %1796
        %v1806 = vlaneseq
        %v1807 = vshrl.u32 %v1806, 7
        %v1808 = vsub.s32 %v1764, %v1807
        %v1809 = vrot.slane %v1783, %v1808
        %v1810 = vadd.s32 %v1764, 4294967288
        %v1811 = vlaneseq
        %v1812 = vshrl.u32 %v1811, 7
        %v1813 = vsub.s32 %v1810, %v1812
        %v1814 = vrot.slane %v1785, %v1813
        %vm1815 = vcmask 130112
        %v1816 = vsel %vm1815, %v1814, %v1809
        %v1817 = vlaneseq
        %v1818 = vshrl.u32 %v1817, 7
        %v1819 = vsub.s32 %v1764, %v1818
        %v1820 = vrot.slane %v1787, %v1819
        %v1821 = vlaneseq
        %v1822 = vshrl.u32 %v1821, 7
        %v1823 = vsub.s32 %v1810, %v1822
        %v1824 = vrot.slane %v1789, %v1823
        %v1825 = vsel %vm1815, %v1824, %v1820
        %v1826 = vlaneseq
        %v1827 = vshrl.u32 %v1826, 7
        %v1828 = vsub.s32 %v1764, %v1827
        %v1829 = vrot.slane %v1791, %v1828
        %v1830 = vlaneseq
        %v1831 = vshrl.u32 %v1830, 7
        %v1832 = vsub.s32 %v1810, %v1831
        %v1833 = vrot.slane %v1793, %v1832
        %v1834 = vsel %vm1815, %v1833, %v1829
        %v1835 = vlaneseq
        %v1836 = vshrl.u32 %v1835, 7
        %v1837 = vsub.s32 %v1764, %v1836
        %v1838 = vrot.slane %v1795, %v1837
        %v1839 = vlaneseq
        %v1840 = vshrl.u32 %v1839, 7
        %v1841 = vsub.s32 %v1810, %v1840
        %v1842 = vrot.slane %v1797, %v1841
        %v1843 = vsel %vm1815, %v1842, %v1838
        %vm1844 = vcmask 1041409
        %v1845 = vsel %vm1844, %v1825, %v1816
        %vm1846 = vcmask 1042434
        %v1847 = vsel %vm1846, %v1834, %v1845
        %vm1848 = vcmask 1043459
        %v1849 = vsel %vm1848, %v1843, %v1847
        %vm1851 = vcmask 125952
        %v1852 = vsel %vm1851, %v1849, 0.0
        %1853 = vadd.xlane.f32.xlu0 %v1852
        %v1854 = vpop.xlane.xlu0 %1853
        %v1856 = vlaneseq
        %v1857 = vshrl.u32 %v1856, 7
        %v1858 = vsub.s32 %v1764, %v1857
        %v1859 = vrot.slane %v1854, %v1858
        %vm1861 = vcmask 24576
        %1862 = vst.msk [vmem:[%s319] sm:$0x1] %vm1861, %v1859
        %s1863 = sand.u32 %s145, 1
        %s1864 = scalar_lea.sflag [#allocation5], %s1863
        %s1865 = sand.u32 %s145, 1
        %s1866 = scalar_lea.vmem [#allocation12], %s1865
        // Predicated region
        $region61: #{tpu_custom_call.1} parent=39 // pred_check
          %p1867 = pneg %p155
        $region62: #{tpu_custom_call.1} parent=39 // pred_check_branch
          %1869 = sbr.rel (%p1867) target = $region64
        $region63: #{tpu_custom_call.1} parent=39 // pred_region
          %s1871 = ssub.s32 16, 16
          %1872 = vsyncadd %s1864, %s1871
          %s1873 = smul.addr %s22, 16
          %s1874 = scalar_lea.hbm %s5, %s1873
          %s1876 = sshll.u32 %s1866, 4
          %s1877 = int_to_ptr.vmem [resolvable:$true] %s1876
          %1879 = dma.vmem_to_hbm [thread:$0]  %s1877, 16, %s1874, %s1864
        $region64: #{tpu_custom_call.1} parent=39 // pred_fallthru
          _
      $region40: #{tpu_custom_call.1} parent=5 // pred_fallthru
        _
      %p1880 = scmp.le.s32.totalorder 2, %s17
      // Predicated region
      $region65: #{tpu_custom_call.1} parent=5 // pred_check
        %p1881 = pneg %p1880
      $region66: #{tpu_custom_call.1} parent=5 // pred_check_branch
        %1883 = sbr.rel (%p1881) target = $region68
      $region67: #{tpu_custom_call.1} parent=5 // pred_region
        %s1884 = ssub.s32 %s17, 2
        // Predicated region
        $region69: #{tpu_custom_call.1} parent=67 // pred_check
          %p1885 = pneg %p161
        $region70: #{tpu_custom_call.1} parent=67 // pred_check_branch
          %1887 = sbr.rel (%p1885) target = $region72
        $region71: #{tpu_custom_call.1} parent=67 // pred_region
          %s1888 = sand.u32 %s146, 1
          %s1889 = scalar_lea.sflag [#allocation5], %s1888
          %s1890 = sand.u32 %s146, 1
          %s1891 = scalar_lea.vmem [#allocation12], %s1890
          %1892 = dma.done %s1889, 16
        $region72: #{tpu_custom_call.1} parent=67 // pred_fallthru
          _
      $region68: #{tpu_custom_call.1} parent=5 // pred_fallthru
        _
    $region6: #{tpu_custom_call.1} parent=1 // loop_footer
      %s21 = sadd.s32 1, %s17
    $region7: #{tpu_custom_call.1} parent=1 // loop_footer_branch
      %16 = sbr.rel target = $region3
    $region8: #{tpu_custom_call.1} parent=1 // loop_exit
      _
    %1893 = vsyncpa [#allocation4], 1
    %s1894 = scalar_lea.sflag [#allocation4], 1
    %1895 = vsyncpa %s1894, 1
    %1896 = vsyncpa [#allocation9], 1
    %1897 = vsyncpa [#allocation5], 1
    %s1898 = scalar_lea.sflag [#allocation5], 1
    %1899 = vsyncpa %s1898, 1
    %1900 = vsyncpa [#allocation6], 1
    %s1901 = scalar_lea.sflag [#allocation6], 1
    %1902 = vsyncpa %s1901, 1

</llo_original>
